<compile_context>
chip_gen: v6e
topology: v6e:2x2x1
jax: 0.10.0
libtpu: 0.0.40
codegen_flags: <defaults>
</compile_context>

<pallas_src>
import functools
from itertools import combinations

import jax
import jax.numpy as jnp
import numpy as np
from jax.experimental import pallas as pl
from jax.experimental.pallas import tpu as pltpu


NUM_CORE_SPLITS = 2  # leading "parallel" grid axis: both TCs on v7x, harmless serial loop elsewhere


def _round_up(x: int, m: int) -> int:
    return (x + m - 1) // m * m


def _physical_vmem_bytes() -> int:
    try:
        return int(pltpu.get_tpu_info().vmem_capacity_bytes)
    except Exception:
        return 64 * 1024 * 1024  # v7x per-TC size: a safe floor on every generation


def _vmem_budget_bytes() -> int:
    phys = _physical_vmem_bytes()
    # ~70% of physical, capped: ~45 MiB on v7x (64 MiB/TC), ~90 MiB on v5e/v6e (128 MiB).
    return int(min(phys * 0.70, 108 * 1024 * 1024))


def _estimate_vmem_need(rows: int, n_pad: int, d_pad: int) -> int:
    emb_tbl = 2 * n_pad * d_pad * 4               # resident table (double-buffered by Pallas)
    idx = 3 * 2 * rows * 512                      # (rows,1) int32 blocks, lane-padded, 2 buffers
    gathered = 3 * rows * d_pad * 4               # a/p/n f32 temporaries
    onehot = 2 * rows * max(n_pad, 128) * 4       # ~2 live one-hot temporaries
    return emb_tbl + idx + gathered + onehot + (2 << 20)


def _pick_tile_rows(T: int, n_pad: int, d_pad: int, budget: int, max_tile_rows: int) -> int:
    rows = min(int(max_tile_rows), _round_up(-(-T // NUM_CORE_SPLITS), 8))
    rows = max(8, _round_up(rows, 8))
    while rows > 8 and _estimate_vmem_need(rows, n_pad, d_pad) > budget:
        rows = max(8, _round_up(rows // 2, 8))
    return rows


def _triplet_loss_kernel(emb_ref, ia_ref, ip_ref, inn_ref,
                         exp_acc, ap_acc, an_acc, reg_acc,
                         *, margin, ap_flag, tile_rows, steps_per_core, num_valid, has_padding):
    c = pl.program_id(0)       # core split ("parallel")
    i = pl.program_id(1)       # reduction step within this split ("arbitrary")

    @pl.when(i == 0)
    def _init():
        exp_acc[...] = jnp.zeros_like(exp_acc)
        ap_acc[...] = jnp.zeros_like(ap_acc)
        an_acc[...] = jnp.zeros_like(an_acc)
        reg_acc[...] = jnp.zeros_like(reg_acc)

    emb = emb_ref[...]                                 # (N_pad, D_pad) f32, resident table
    n_pad = emb.shape[0]
    lane_ids = jax.lax.broadcasted_iota(jnp.int32, (tile_rows, n_pad), 1)

    def gather(idx_col):
        # Exact gather via one-hot f32 matmul on the MXU (indices never hit padded rows).
        onehot = jnp.where(idx_col == lane_ids, 1.0, 0.0).astype(jnp.float32)
        return jnp.dot(onehot, emb, preferred_element_type=jnp.float32)   # (tile_rows, D_pad)

    a = gather(ia_ref[...])
    p = gather(ip_ref[...])
    n = gather(inn_ref[...])

    # Row-wise dots on the VPU + one lane reduction per row (no T x T score tile).
    ap = jnp.clip(jnp.sum(a * p, axis=-1, keepdims=True), -1.0, 1.0)      # (tile_rows, 1)
    an = jnp.clip(jnp.sum(a * n, axis=-1, keepdims=True), -1.0, 1.0)

    exp_col = jnp.exp((an - ap) * (1.0 / margin))                         # EUP
    reg_col = jnp.exp(an - ap * margin) if ap_flag else None

    def accumulate(valid):
        def tile_sum(col):
            if valid is not None:
                col = jnp.where(valid, col, 0.0)
            return jnp.sum(col, axis=0, keepdims=True)                    # (1, 1) partial sum
        exp_acc[0, :, :] += tile_sum(exp_col)
        ap_acc[0, :, :] += tile_sum(ap)
        an_acc[0, :, :] += tile_sum(an)
        if ap_flag:
            reg_acc[0, :, :] += tile_sum(reg_col)

    if not has_padding:
        # T is an exact multiple of the tiling: no masking anywhere (trace-time decision).
        accumulate(None)
    else:
        row0 = (c * steps_per_core + i) * tile_rows
        tile_is_clean = row0 + tile_rows <= num_valid

        @pl.when(tile_is_clean)             # fast path for every tile outside the padded tail
        def _fast():
            accumulate(None)

        @pl.when(jnp.logical_not(tile_is_clean))
        def _masked():
            rows = row0 + jax.lax.broadcasted_iota(jnp.int32, (tile_rows, 1), 0)
            accumulate(rows < num_valid)


def online_triplet_loss(embeddings, triplets, *, margin=0.7, ap_weight=0.0,
                        ap_flag=False, max_tile_rows=4096):
    """Fused OnlineTripletLoss forward. Returns (loss, mean(1-ap), mean(1-an))."""
    emb = jnp.asarray(embeddings)
    trips = jnp.asarray(triplets, dtype=jnp.int32)
    T = int(trips.shape[0])
    N, D = int(emb.shape[0]), int(emb.shape[1])

    # Embeddings table stays resident in VMEM; pad to (8,128)-friendly dims, compute in f32.
    n_pad = _round_up(N, 8)
    d_pad = _round_up(D, 128)
    emb_p = jnp.pad(emb.astype(jnp.float32), ((0, n_pad - N), (0, d_pad - D)))
    # TODO(synk): an embeddings table far larger than the VMEM budget would need a streamed /
    #             pre-gathered fallback; for this per-batch loss the table is always small.

    budget = _vmem_budget_bytes()
    tile_rows = _pick_tile_rows(T, n_pad, d_pad, budget, max_tile_rows)
    T_pad = _round_up(T, NUM_CORE_SPLITS * tile_rows)
    steps_per_core = T_pad // (NUM_CORE_SPLITS * tile_rows)
    has_padding = T_pad != T

    # Index columns are the only per-triplet data streamed from HBM.
    idx = trips
    if has_padding:
        idx = jnp.pad(idx, ((0, T_pad - T), (0, 0)))
    ia, ip, inn = idx[:, 0:1], idx[:, 1:2], idx[:, 2:3]

    grid = (NUM_CORE_SPLITS, steps_per_core)
    emb_spec = pl.BlockSpec((n_pad, d_pad), lambda c, i: (0, 0))   # constant block -> fetched once
    idx_spec = pl.BlockSpec((tile_rows, 1), lambda c, i: (c * steps_per_core + i, 0))
    acc_spec = pl.BlockSpec((1, 1, 1), lambda c, i: (c, 0, 0))
    acc_shape = jax.ShapeDtypeStruct((NUM_CORE_SPLITS, 1, 1), jnp.float32)

    need = _estimate_vmem_need(tile_rows, n_pad, d_pad)
    vmem_limit = int(min(budget, max(32 * 1024 * 1024, 2 * need)))

    kernel = functools.partial(
        _triplet_loss_kernel,
        margin=float(margin),
        ap_flag=bool(ap_flag),
        tile_rows=tile_rows,
        steps_per_core=steps_per_core,
        num_valid=T,
        has_padding=has_padding,
    )

    exp_o, ap_o, an_o, reg_o = pl.pallas_call(
        kernel,
        grid=grid,
        in_specs=[emb_spec, idx_spec, idx_spec, idx_spec],
        out_specs=(acc_spec, acc_spec, acc_spec, acc_spec),
        out_shape=(acc_shape, acc_shape, acc_shape, acc_shape),
        compiler_params=pltpu.CompilerParams(
            dimension_semantics=("parallel", "arbitrary"),
            vmem_limit_bytes=vmem_limit,
        ),
    )(emb_p, ia, ip, inn)

    t = np.float32(T)
    loss = jnp.sum(exp_o) / t
    if ap_flag:
        loss = loss + float(ap_weight) * jnp.sum(reg_o)
    ap_mean = 1.0 - jnp.sum(ap_o) / t
    an_mean = 1.0 - jnp.sum(an_o) / t
    return loss, ap_mean, an_mean


def online_triplet_loss_ref(embeddings, triplets, *, margin=0.7, ap_weight=0.0, ap_flag=False):
    """Pure-JAX reference with the original PyTorch semantics."""
    a = embeddings[triplets[:, 0]]
    p = embeddings[triplets[:, 1]]
    n = embeddings[triplets[:, 2]]
    ap = jnp.clip(jnp.sum(a * p, axis=-1), -1.0, 1.0)
    an = jnp.clip(jnp.sum(a * n, axis=-1), -1.0, 1.0)
    loss = jnp.mean(jnp.exp((an - ap) / margin))
    if ap_flag:
        loss = loss + ap_weight * jnp.sum(jnp.exp(an - ap * margin))
    return loss, jnp.mean(1.0 - ap), jnp.mean(1.0 - an)


def _all_triplets(labels):
    """Deterministic host-side 'all triplets' miner (stand-in for triplet_selector)."""
    labels = np.asarray(labels)
    trips = []
    for lab in np.unique(labels):
        pos = np.flatnonzero(labels == lab)
        neg = np.flatnonzero(labels != lab)
        if len(pos) < 2 or len(neg) == 0:
            continue
        for a_i, p_i in combinations(pos.tolist(), 2):
            for n_i in neg.tolist():
                trips.append((a_i, p_i, n_i))
    return np.asarray(trips, dtype=np.int32)


if __name__ == "__main__":
    key = jax.random.PRNGKey(0)
    num_classes, per_class, dim = 4, 4, 32
    num_emb = num_classes * per_class

    labels = np.repeat(np.arange(num_classes), per_class).astype(np.int32)
    emb = jax.random.normal(key, (num_emb, dim), dtype=jnp.float32)
    emb = emb / jnp.linalg.norm(emb, axis=-1, keepdims=True)

    triplets = jnp.asarray(_all_triplets(labels))   # (288, 3)

    cases = [
        # small tiles -> multiple reduction steps + padded-tail mask path
        dict(margin=0.7, ap_weight=0.0, ap_flag=False, max_tile_rows=64),
        # ap_flag regularizer path on the same loaded tiles
        dict(margin=0.7, ap_weight=0.01, ap_flag=True, max_tile_rows=64),
        # default large tiles -> single step per core, unmasked fast path
        dict(margin=0.7, ap_weight=0.0, ap_flag=False, max_tile_rows=4096),
    ]
    for cfg in cases:
        got = jax.block_until_ready(online_triplet_loss(emb, triplets, **cfg))
        ref = online_triplet_loss_ref(emb, triplets, margin=cfg["margin"],
                                      ap_weight=cfg["ap_weight"], ap_flag=cfg["ap_flag"])
        for g, w in zip(got, ref):
            np.testing.assert_allclose(np.asarray(g), np.asarray(w), rtol=1e-4, atol=1e-5)

    print("KERNEL_OK")
</pallas_src>

<mosaic_0001>
module attributes {stable_mosaic.version = 11 : i64} {
  func.func @_triplet_loss_kernel(%arg0: i32, %arg1: i32, %arg2: memref<16x128xf32, #tpu.memory_space<vmem>>, %arg3: memref<64x1xi32, #tpu.memory_space<vmem>>, %arg4: memref<64x1xi32, #tpu.memory_space<vmem>>, %arg5: memref<64x1xi32, #tpu.memory_space<vmem>>, %arg6: memref<1x1x1xf32, #tpu.memory_space<vmem>>, %arg7: memref<1x1x1xf32, #tpu.memory_space<vmem>>, %arg8: memref<1x1x1xf32, #tpu.memory_space<vmem>>, %arg9: memref<1x1x1xf32, #tpu.memory_space<vmem>>) attributes {dimension_semantics = [#tpu.dimension_semantics<parallel>, #tpu.dimension_semantics<arbitrary>], iteration_bounds = array<i64: 2, 3>, scalar_prefetch = 0 : i64, scratch_operands = 0 : i64, tpu.core_type = #tpu.core_type<tc>, window_params = [{pipeline_mode = #tpu.pipeline_mode<synchronous>, transform_indices = @transform_0, window_bounds = array<i64: 16, 128>}, {transform_indices = @transform_1, window_bounds = array<i64: 64, 1>}, {transform_indices = @transform_2, window_bounds = array<i64: 64, 1>}, {transform_indices = @transform_3, window_bounds = array<i64: 64, 1>}, {transform_indices = @transform_4, window_bounds = array<i64: 1, 1, 1>}, {transform_indices = @transform_5, window_bounds = array<i64: 1, 1, 1>}, {transform_indices = @transform_6, window_bounds = array<i64: 1, 1, 1>}, {transform_indices = @transform_7, window_bounds = array<i64: 1, 1, 1>}]} {
    %c0_i32 = arith.constant 0 : i32
    %0 = arith.cmpi eq, %arg1, %c0_i32 : i32
    %1 = arith.extui %0 : i1 to i32
    %c0_i32_0 = arith.constant 0 : i32
    %2 = arith.cmpi ne, %1, %c0_i32_0 : i32
    scf.if %2 {
      %cst_26 = arith.constant 0.000000e+00 : f32
      %54 = vector.broadcast %cst_26 : f32 to vector<1x1x1xf32>
      %c0_27 = arith.constant 0 : index
      %c0_28 = arith.constant 0 : index
      %c0_29 = arith.constant 0 : index
      %55 = vector.load %arg6[%c0_27, %c0_28, %c0_29] : memref<1x1x1xf32, #tpu.memory_space<vmem>>, vector<1x1x1xf32>
      tpu.vector_store %arg6[%c0_27, %c0_28, %c0_29], %54 {strides = array<i32>} : memref<1x1x1xf32, #tpu.memory_space<vmem>>, vector<1x1x1xf32>,
      %cst_30 = arith.constant 0.000000e+00 : f32
      %56 = vector.broadcast %cst_30 : f32 to vector<1x1x1xf32>
      %c0_31 = arith.constant 0 : index
      %c0_32 = arith.constant 0 : index
      %c0_33 = arith.constant 0 : index
      %57 = vector.load %arg7[%c0_31, %c0_32, %c0_33] : memref<1x1x1xf32, #tpu.memory_space<vmem>>, vector<1x1x1xf32>
      tpu.vector_store %arg7[%c0_31, %c0_32, %c0_33], %56 {strides = array<i32>} : memref<1x1x1xf32, #tpu.memory_space<vmem>>, vector<1x1x1xf32>,
      %cst_34 = arith.constant 0.000000e+00 : f32
      %58 = vector.broadcast %cst_34 : f32 to vector<1x1x1xf32>
      %c0_35 = arith.constant 0 : index
      %c0_36 = arith.constant 0 : index
      %c0_37 = arith.constant 0 : index
      %59 = vector.load %arg8[%c0_35, %c0_36, %c0_37] : memref<1x1x1xf32, #tpu.memory_space<vmem>>, vector<1x1x1xf32>
      tpu.vector_store %arg8[%c0_35, %c0_36, %c0_37], %58 {strides = array<i32>} : memref<1x1x1xf32, #tpu.memory_space<vmem>>, vector<1x1x1xf32>,
      %cst_38 = arith.constant 0.000000e+00 : f32
      %60 = vector.broadcast %cst_38 : f32 to vector<1x1x1xf32>
      %c0_39 = arith.constant 0 : index
      %c0_40 = arith.constant 0 : index
      %c0_41 = arith.constant 0 : index
      %61 = vector.load %arg9[%c0_39, %c0_40, %c0_41] : memref<1x1x1xf32, #tpu.memory_space<vmem>>, vector<1x1x1xf32>
      tpu.vector_store %arg9[%c0_39, %c0_40, %c0_41], %60 {strides = array<i32>} : memref<1x1x1xf32, #tpu.memory_space<vmem>>, vector<1x1x1xf32>,
    } else {
    }
    %c0 = arith.constant 0 : index
    %c0_1 = arith.constant 0 : index
    %3 = vector.load %arg2[%c0, %c0_1] : memref<16x128xf32, #tpu.memory_space<vmem>>, vector<16x128xf32>
    %4 = tpu.iota {dimensions = array<i32: 1>} : vector<64x16xi32>
    %c0_2 = arith.constant 0 : index
    %c0_3 = arith.constant 0 : index
    %5 = vector.load %arg3[%c0_2, %c0_3] : memref<64x1xi32, #tpu.memory_space<vmem>>, vector<64x1xi32>
    %6 = vector.broadcast %5 : vector<64x1xi32> to vector<64x16xi32>
    %7 = arith.cmpi eq, %6, %4 : vector<64x16xi32>
    %cst = arith.constant 1.000000e+00 : f32
    %cst_4 = arith.constant 0.000000e+00 : f32
    %8 = vector.broadcast %cst : f32 to vector<64x16xf32>
    %9 = vector.broadcast %cst_4 : f32 to vector<64x16xf32>
    %10 = arith.select %7, %8, %9 : vector<64x16xi1>, vector<64x16xf32>
    %cst_5 = arith.constant dense<0.000000e+00> : vector<64x128xf32>
    %11 = tpu.matmul %10, %3, %cst_5 {dimension_numbers = #tpu.dot_dimension_numbers<[1], [0], [0], [1], [0, 0, 1, 1], [], []>} : vector<64x16xf32>, vector<16x128xf32>, vector<64x128xf32> -> vector<64x128xf32>
    %c0_6 = arith.constant 0 : index
    %c0_7 = arith.constant 0 : index
    %12 = vector.load %arg4[%c0_6, %c0_7] : memref<64x1xi32, #tpu.memory_space<vmem>>, vector<64x1xi32>
    %13 = vector.broadcast %12 : vector<64x1xi32> to vector<64x16xi32>
    %14 = arith.cmpi eq, %13, %4 : vector<64x16xi32>
    %cst_8 = arith.constant 1.000000e+00 : f32
    %cst_9 = arith.constant 0.000000e+00 : f32
    %15 = vector.broadcast %cst_8 : f32 to vector<64x16xf32>
    %16 = vector.broadcast %cst_9 : f32 to vector<64x16xf32>
    %17 = arith.select %14, %15, %16 : vector<64x16xi1>, vector<64x16xf32>
    %cst_10 = arith.constant dense<0.000000e+00> : vector<64x128xf32>
    %18 = tpu.matmul %17, %3, %cst_10 {dimension_numbers = #tpu.dot_dimension_numbers<[1], [0], [0], [1], [0, 0, 1, 1], [], []>} : vector<64x16xf32>, vector<16x128xf32>, vector<64x128xf32> -> vector<64x128xf32>
    %c0_11 = arith.constant 0 : index
    %c0_12 = arith.constant 0 : index
    %19 = vector.load %arg5[%c0_11, %c0_12] : memref<64x1xi32, #tpu.memory_space<vmem>>, vector<64x1xi32>
    %20 = vector.broadcast %19 : vector<64x1xi32> to vector<64x16xi32>
    %21 = arith.cmpi eq, %20, %4 : vector<64x16xi32>
    %cst_13 = arith.constant 1.000000e+00 : f32
    %cst_14 = arith.constant 0.000000e+00 : f32
    %22 = vector.broadcast %cst_13 : f32 to vector<64x16xf32>
    %23 = vector.broadcast %cst_14 : f32 to vector<64x16xf32>
    %24 = arith.select %21, %22, %23 : vector<64x16xi1>, vector<64x16xf32>
    %cst_15 = arith.constant dense<0.000000e+00> : vector<64x128xf32>
    %25 = tpu.matmul %24, %3, %cst_15 {dimension_numbers = #tpu.dot_dimension_numbers<[1], [0], [0], [1], [0, 0, 1, 1], [], []>} : vector<64x16xf32>, vector<16x128xf32>, vector<64x128xf32> -> vector<64x128xf32>
    %26 = arith.mulf %11, %18 : vector<64x128xf32>
    %cst_16 = arith.constant dense<0.000000e+00> : vector<64xf32>
    %27 = vector.multi_reduction <add>, %26, %cst_16 [1] : vector<64x128xf32> to vector<64xf32>
    %28 = vector.shape_cast %27 : vector<64xf32> to vector<64x1xf32>
    %cst_17 = arith.constant -1.000000e+00 : f32
    %cst_18 = arith.constant 1.000000e+00 : f32
    %29 = vector.broadcast %cst_17 : f32 to vector<64x1xf32>
    %30 = arith.maximumf %29, %28 : vector<64x1xf32>
    %31 = vector.broadcast %cst_18 : f32 to vector<64x1xf32>
    %32 = arith.minimumf %31, %30 : vector<64x1xf32>
    %33 = arith.mulf %11, %25 : vector<64x128xf32>
    %cst_19 = arith.constant dense<0.000000e+00> : vector<64xf32>
    %34 = vector.multi_reduction <add>, %33, %cst_19 [1] : vector<64x128xf32> to vector<64xf32>
    %35 = vector.shape_cast %34 : vector<64xf32> to vector<64x1xf32>
    %cst_20 = arith.constant -1.000000e+00 : f32
    %cst_21 = arith.constant 1.000000e+00 : f32
    %36 = vector.broadcast %cst_20 : f32 to vector<64x1xf32>
    %37 = arith.maximumf %36, %35 : vector<64x1xf32>
    %38 = vector.broadcast %cst_21 : f32 to vector<64x1xf32>
    %39 = arith.minimumf %38, %37 : vector<64x1xf32>
    %40 = arith.subf %39, %32 : vector<64x1xf32>
    %cst_22 = arith.constant 1.42857146 : f32
    %41 = vector.broadcast %cst_22 : f32 to vector<64x1xf32>
    %42 = arith.mulf %40, %41 : vector<64x1xf32>
    %43 = math.exp %42 : vector<64x1xf32>
    %c3_i32 = arith.constant 3 : i32
    %44 = arith.muli %arg0, %c3_i32 : i32
    %45 = arith.addi %44, %arg1 : i32
    %c64_i32 = arith.constant 64 : i32
    %46 = arith.muli %45, %c64_i32 : i32
    %c64_i32_23 = arith.constant 64 : i32
    %47 = arith.addi %46, %c64_i32_23 : i32
    %c288_i32 = arith.constant 288 : i32
    %48 = arith.cmpi sle, %47, %c288_i32 : i32
    %49 = arith.extui %48 : i1 to i32
    %c0_i32_24 = arith.constant 0 : i32
    %50 = arith.cmpi ne, %49, %c0_i32_24 : i32
    scf.if %50 {
      %c0_26 = arith.constant 0 : index
      %c0_27 = arith.constant 0 : index
      %c0_28 = arith.constant 0 : index
      %54 = vector.load %arg6[%c0_26, %c0_27, %c0_28] : memref<1x1x1xf32, #tpu.memory_space<vmem>>, vector<1x1x1xf32>
      %55 = vector.shape_cast %54 : vector<1x1x1xf32> to vector<1x1xf32>
      %cst_29 = arith.constant dense<0.000000e+00> : vector<1xf32>
      %56 = vector.multi_reduction <add>, %43, %cst_29 [0] : vector<64x1xf32> to vector<1xf32>
      %57 = vector.shape_cast %56 : vector<1xf32> to vector<1x1xf32>
      %58 = arith.addf %55, %57 : vector<1x1xf32>
      %c0_30 = arith.constant 0 : index
      %c0_31 = arith.constant 0 : index
      %c0_32 = arith.constant 0 : index
      %59 = vector.load %arg6[%c0_30, %c0_31, %c0_32] : memref<1x1x1xf32, #tpu.memory_space<vmem>>, vector<1x1x1xf32>
      %60 = vector.shape_cast %59 : vector<1x1x1xf32> to vector<1x1xf32>
      %61 = vector.shape_cast %58 : vector<1x1xf32> to vector<1x1x1xf32>
      tpu.vector_store %arg6[%c0_30, %c0_31, %c0_32], %61 {strides = array<i32>} : memref<1x1x1xf32, #tpu.memory_space<vmem>>, vector<1x1x1xf32>,
      %c0_33 = arith.constant 0 : index
      %c0_34 = arith.constant 0 : index
      %c0_35 = arith.constant 0 : index
      %62 = vector.load %arg7[%c0_33, %c0_34, %c0_35] : memref<1x1x1xf32, #tpu.memory_space<vmem>>, vector<1x1x1xf32>
      %63 = vector.shape_cast %62 : vector<1x1x1xf32> to vector<1x1xf32>
      %cst_36 = arith.constant dense<0.000000e+00> : vector<1xf32>
      %64 = vector.multi_reduction <add>, %32, %cst_36 [0] : vector<64x1xf32> to vector<1xf32>
      %65 = vector.shape_cast %64 : vector<1xf32> to vector<1x1xf32>
      %66 = arith.addf %63, %65 : vector<1x1xf32>
      %c0_37 = arith.constant 0 : index
      %c0_38 = arith.constant 0 : index
      %c0_39 = arith.constant 0 : index
      %67 = vector.load %arg7[%c0_37, %c0_38, %c0_39] : memref<1x1x1xf32, #tpu.memory_space<vmem>>, vector<1x1x1xf32>
      %68 = vector.shape_cast %67 : vector<1x1x1xf32> to vector<1x1xf32>
      %69 = vector.shape_cast %66 : vector<1x1xf32> to vector<1x1x1xf32>
      tpu.vector_store %arg7[%c0_37, %c0_38, %c0_39], %69 {strides = array<i32>} : memref<1x1x1xf32, #tpu.memory_space<vmem>>, vector<1x1x1xf32>,
      %c0_40 = arith.constant 0 : index
      %c0_41 = arith.constant 0 : index
      %c0_42 = arith.constant 0 : index
      %70 = vector.load %arg8[%c0_40, %c0_41, %c0_42] : memref<1x1x1xf32, #tpu.memory_space<vmem>>, vector<1x1x1xf32>
      %71 = vector.shape_cast %70 : vector<1x1x1xf32> to vector<1x1xf32>
      %cst_43 = arith.constant dense<0.000000e+00> : vector<1xf32>
      %72 = vector.multi_reduction <add>, %39, %cst_43 [0] : vector<64x1xf32> to vector<1xf32>
      %73 = vector.shape_cast %72 : vector<1xf32> to vector<1x1xf32>
      %74 = arith.addf %71, %73 : vector<1x1xf32>
      %c0_44 = arith.constant 0 : index
      %c0_45 = arith.constant 0 : index
      %c0_46 = arith.constant 0 : index
      %75 = vector.load %arg8[%c0_44, %c0_45, %c0_46] : memref<1x1x1xf32, #tpu.memory_space<vmem>>, vector<1x1x1xf32>
      %76 = vector.shape_cast %75 : vector<1x1x1xf32> to vector<1x1xf32>
      %77 = vector.shape_cast %74 : vector<1x1xf32> to vector<1x1x1xf32>
      tpu.vector_store %arg8[%c0_44, %c0_45, %c0_46], %77 {strides = array<i32>} : memref<1x1x1xf32, #tpu.memory_space<vmem>>, vector<1x1x1xf32>,
    } else {
    }
    %true = arith.constant true
    %51 = arith.xori %48, %true : i1
    %52 = arith.extui %51 : i1 to i32
    %c0_i32_25 = arith.constant 0 : i32
    %53 = arith.cmpi ne, %52, %c0_i32_25 : i32
    scf.if %53 {
      %54 = tpu.iota {dimensions = array<i32: 0>} : vector<64x1xi32>
      %55 = vector.broadcast %46 : i32 to vector<64x1xi32>
      %56 = arith.addi %55, %54 : vector<64x1xi32>
      %c288_i32_26 = arith.constant 288 : i32
      %57 = vector.broadcast %c288_i32_26 : i32 to vector<64x1xi32>
      %58 = arith.cmpi slt, %56, %57 : vector<64x1xi32>
      %c0_27 = arith.constant 0 : index
      %c0_28 = arith.constant 0 : index
      %c0_29 = arith.constant 0 : index
      %59 = vector.load %arg6[%c0_27, %c0_28, %c0_29] : memref<1x1x1xf32, #tpu.memory_space<vmem>>, vector<1x1x1xf32>
      %60 = vector.shape_cast %59 : vector<1x1x1xf32> to vector<1x1xf32>
      %cst_30 = arith.constant 0.000000e+00 : f32
      %61 = vector.broadcast %cst_30 : f32 to vector<64x1xf32>
      %62 = arith.select %58, %43, %61 : vector<64x1xi1>, vector<64x1xf32>
      %cst_31 = arith.constant dense<0.000000e+00> : vector<1xf32>
      %63 = vector.multi_reduction <add>, %62, %cst_31 [0] : vector<64x1xf32> to vector<1xf32>
      %64 = vector.shape_cast %63 : vector<1xf32> to vector<1x1xf32>
      %65 = arith.addf %60, %64 : vector<1x1xf32>
      %c0_32 = arith.constant 0 : index
      %c0_33 = arith.constant 0 : index
      %c0_34 = arith.constant 0 : index
      %66 = vector.load %arg6[%c0_32, %c0_33, %c0_34] : memref<1x1x1xf32, #tpu.memory_space<vmem>>, vector<1x1x1xf32>
      %67 = vector.shape_cast %66 : vector<1x1x1xf32> to vector<1x1xf32>
      %68 = vector.shape_cast %65 : vector<1x1xf32> to vector<1x1x1xf32>
      tpu.vector_store %arg6[%c0_32, %c0_33, %c0_34], %68 {strides = array<i32>} : memref<1x1x1xf32, #tpu.memory_space<vmem>>, vector<1x1x1xf32>,
      %c0_35 = arith.constant 0 : index
      %c0_36 = arith.constant 0 : index
      %c0_37 = arith.constant 0 : index
      %69 = vector.load %arg7[%c0_35, %c0_36, %c0_37] : memref<1x1x1xf32, #tpu.memory_space<vmem>>, vector<1x1x1xf32>
      %70 = vector.shape_cast %69 : vector<1x1x1xf32> to vector<1x1xf32>
      %cst_38 = arith.constant 0.000000e+00 : f32
      %71 = vector.broadcast %cst_38 : f32 to vector<64x1xf32>
      %72 = arith.select %58, %32, %71 : vector<64x1xi1>, vector<64x1xf32>
      %cst_39 = arith.constant dense<0.000000e+00> : vector<1xf32>
      %73 = vector.multi_reduction <add>, %72, %cst_39 [0] : vector<64x1xf32> to vector<1xf32>
      %74 = vector.shape_cast %73 : vector<1xf32> to vector<1x1xf32>
      %75 = arith.addf %70, %74 : vector<1x1xf32>
      %c0_40 = arith.constant 0 : index
      %c0_41 = arith.constant 0 : index
      %c0_42 = arith.constant 0 : index
      %76 = vector.load %arg7[%c0_40, %c0_41, %c0_42] : memref<1x1x1xf32, #tpu.memory_space<vmem>>, vector<1x1x1xf32>
      %77 = vector.shape_cast %76 : vector<1x1x1xf32> to vector<1x1xf32>
      %78 = vector.shape_cast %75 : vector<1x1xf32> to vector<1x1x1xf32>
      tpu.vector_store %arg7[%c0_40, %c0_41, %c0_42], %78 {strides = array<i32>} : memref<1x1x1xf32, #tpu.memory_space<vmem>>, vector<1x1x1xf32>,
      %c0_43 = arith.constant 0 : index
      %c0_44 = arith.constant 0 : index
      %c0_45 = arith.constant 0 : index
      %79 = vector.load %arg8[%c0_43, %c0_44, %c0_45] : memref<1x1x1xf32, #tpu.memory_space<vmem>>, vector<1x1x1xf32>
      %80 = vector.shape_cast %79 : vector<1x1x1xf32> to vector<1x1xf32>
      %cst_46 = arith.constant 0.000000e+00 : f32
      %81 = vector.broadcast %cst_46 : f32 to vector<64x1xf32>
      %82 = arith.select %58, %39, %81 : vector<64x1xi1>, vector<64x1xf32>
      %cst_47 = arith.constant dense<0.000000e+00> : vector<1xf32>
      %83 = vector.multi_reduction <add>, %82, %cst_47 [0] : vector<64x1xf32> to vector<1xf32>
      %84 = vector.shape_cast %83 : vector<1xf32> to vector<1x1xf32>
      %85 = arith.addf %80, %84 : vector<1x1xf32>
      %c0_48 = arith.constant 0 : index
      %c0_49 = arith.constant 0 : index
      %c0_50 = arith.constant 0 : index
      %86 = vector.load %arg8[%c0_48, %c0_49, %c0_50] : memref<1x1x1xf32, #tpu.memory_space<vmem>>, vector<1x1x1xf32>
      %87 = vector.shape_cast %86 : vector<1x1x1xf32> to vector<1x1xf32>
      %88 = vector.shape_cast %85 : vector<1x1xf32> to vector<1x1x1xf32>
      tpu.vector_store %arg8[%c0_48, %c0_49, %c0_50], %88 {strides = array<i32>} : memref<1x1x1xf32, #tpu.memory_space<vmem>>, vector<1x1x1xf32>,
    } else {
    }
    return
  }
  func.func @transform_0(%arg0: i32, %arg1: i32) -> (i32, i32) {
    %c0_i32 = arith.constant 0 : i32
    %c0_i32_0 = arith.constant 0 : i32
    %c0_i32_1 = arith.constant 0 : i32
    return %c0_i32, %c0_i32_0 : i32, i32
  }
  func.func @transform_1(%arg0: i32, %arg1: i32) -> (i32, i32) {
    %c3_i32 = arith.constant 3 : i32
    %0 = arith.muli %arg0, %c3_i32 : i32
    %1 = arith.addi %0, %arg1 : i32
    %c0_i32 = arith.constant 0 : i32
    %c0_i32_0 = arith.constant 0 : i32
    return %1, %c0_i32 : i32, i32
  }
  func.func @transform_2(%arg0: i32, %arg1: i32) -> (i32, i32) {
    %c3_i32 = arith.constant 3 : i32
    %0 = arith.muli %arg0, %c3_i32 : i32
    %1 = arith.addi %0, %arg1 : i32
    %c0_i32 = arith.constant 0 : i32
    %c0_i32_0 = arith.constant 0 : i32
    return %1, %c0_i32 : i32, i32
  }
  func.func @transform_3(%arg0: i32, %arg1: i32) -> (i32, i32) {
    %c3_i32 = arith.constant 3 : i32
    %0 = arith.muli %arg0, %c3_i32 : i32
    %1 = arith.addi %0, %arg1 : i32
    %c0_i32 = arith.constant 0 : i32
    %c0_i32_0 = arith.constant 0 : i32
    return %1, %c0_i32 : i32, i32
  }
  func.func @transform_4(%arg0: i32, %arg1: i32) -> (i32, i32, i32) {
    %c0_i32 = arith.constant 0 : i32
    %c0_i32_0 = arith.constant 0 : i32
    %c0_i32_1 = arith.constant 0 : i32
    return %arg0, %c0_i32, %c0_i32_0 : i32, i32, i32
  }
  func.func @transform_5(%arg0: i32, %arg1: i32) -> (i32, i32, i32) {
    %c0_i32 = arith.constant 0 : i32
    %c0_i32_0 = arith.constant 0 : i32
    %c0_i32_1 = arith.constant 0 : i32
    return %arg0, %c0_i32, %c0_i32_0 : i32, i32, i32
  }
  func.func @transform_6(%arg0: i32, %arg1: i32) -> (i32, i32, i32) {
    %c0_i32 = arith.constant 0 : i32
    %c0_i32_0 = arith.constant 0 : i32
    %c0_i32_1 = arith.constant 0 : i32
    return %arg0, %c0_i32, %c0_i32_0 : i32, i32, i32
  }
  func.func @transform_7(%arg0: i32, %arg1: i32) -> (i32, i32, i32) {
    %c0_i32 = arith.constant 0 : i32
    %c0_i32_0 = arith.constant 0 : i32
    %c0_i32_1 = arith.constant 0 : i32
    return %arg0, %c0_i32, %c0_i32_0 : i32, i32, i32
  }
}

</mosaic_0001>

<llo_original>
// kernel: tpu_custom_call.1
$region0: #{tpu_custom_call.1}
  #allocation0 [shape = 'u32[]', space=smem, size = 0x4, offset = 0x4, fixed_abs, tag = 'smem constant byte address 0x4 - core index']
  #allocation1 [shape = 'u32[144,128]{1,0:T(1,128)}', space=vmem, size = 0x12000, scoped, tag = 'internal scratch']
  %s0 = inlined_call_operand.vmem [shape: f32[16,128], index: 0, kind: input, shape index: {}]
  %s1 = inlined_call_operand.vmem [shape: s32[384,1], index: 1, kind: input, shape index: {}]
  %s2 = inlined_call_operand.vmem [shape: s32[384,1], index: 2, kind: input, shape index: {}]
  %s3 = inlined_call_operand.vmem [shape: s32[384,1], index: 3, kind: input, shape index: {}]
  %s4 = inlined_call_operand.vmem [shape: f32[2,1,1], index: 4, kind: output, shape index: {0}]
  %s5 = inlined_call_operand.vmem [shape: f32[2,1,1], index: 5, kind: output, shape index: {1}]
  %s6 = inlined_call_operand.vmem [shape: f32[2,1,1], index: 6, kind: output, shape index: {2}]
  %s7 = inlined_call_operand.vmem [shape: f32[2,1,1], index: 7, kind: output, shape index: {3}]
  %8 = xla_tuple %s4, %s5, %s6, %s7
  %s9 = sld [smem:[#allocation0]]
  $region85: #{tpu_custom_call.1} parent=0
    _
  %s11 = ssub.s32 1, %s9
  %s12 = scalar_select 0, %s11, %s9
  loop: start=0, step=1, limit=8
  $region2: #{tpu_custom_call.1} parent=0 // loop_pre_header
    _
  $region3: #{tpu_custom_call.1} parent=0 // loop_header
    %s14 = sphi 0, %s18
    %p15 = scmp.ge.s32.totalorder %s14, 8
    %s21 = sphi 0, %s33
    %s22 = sphi 0, %s29
    %s23 = sphi 0, %s21
    %s24 = sphi 0, %s22
    %s25 = sphi 0, %s23
    %s26 = sphi 0, %s24
    %s34 = sphi 0, %s34
    %s36 = sphi 0, %s34
    %s37 = sphi 0, %s36
    %s51 = sphi 0, %s37
    %s61 = sphi 0, %s63
    %s64 = sphi 0, %s61
    %s65 = sphi 0, %s64
    %s81 = sphi 0, %s65
    %s91 = sphi 0, %s93
    %s94 = sphi 0, %s91
    %s95 = sphi 0, %s94
    %s111 = sphi 0, %s95
    %s121 = sphi 0, %s123
    %s124 = sphi 0, %s121
    %s125 = sphi 0, %s124
    %s141 = sphi 0, %s125
    %s147 = sphi 0, %s149
    %s150 = sphi 0, %s147
    %s151 = sphi 0, %s150
    %s167 = sphi 0, %s151
    %s173 = sphi 0, %s175
    %s176 = sphi 0, %s173
    %s177 = sphi 0, %s176
    %s193 = sphi 0, %s177
    %s199 = sphi 0, %s201
    %s202 = sphi 0, %s199
    %s203 = sphi 0, %s202
    %s219 = sphi 0, %s203
    %s225 = sphi 0, %s227
    %s228 = sphi 0, %s225
    %s229 = sphi 0, %s228
    %s245 = sphi 0, %s229
  $region4: #{tpu_custom_call.1} parent=0 // loop_header_branch
    %17 = sbr.rel (%p15) target = $region8
  $region5: #{tpu_custom_call.1} parent=0 // loop_body
    %s19 = ssub.s32 %s14, 1
    %s20 = ssub.s32 %s14, 2
    %s27 = sadd.s32 1, %s22
    %p28 = scmp.ge.s32.totalorder %s27, 3
    %s29 = scalar_select %p28, 0, %s27
    %s30 = sadd.s32 1, %s21
    %s31 = scalar_select %p28, %s30, %s21
    %p32 = scmp.ge.s32.totalorder %s31, 2
    %s33 = scalar_select %p32, 0, %s31
    %s35 = sadd.s32 %s34, 1
    %p38 = scmp.eq.s32.totalorder %s14, 5
    %p39 = scmp.ne.s32.totalorder %s34, %s36
    %p40 = scmp.eq.s32.totalorder %s14, 0
    %p41 = por %p39, %p40
    %p42 = scmp.ne.s32.totalorder %s34, %s36
    %p43 = scmp.eq.s32.totalorder %s19, 5
    %p44 = por %p42, %p43
    %p45 = scmp.ne.s32.totalorder %s36, %s37
    %p46 = scmp.eq.s32.totalorder %s19, 0
    %p47 = por %p45, %p46
    %p48 = scmp.ne.s32.totalorder %s36, %s37
    %p49 = scmp.eq.s32.totalorder %s20, 5
    %p50 = por %p48, %p49
    %p52 = scmp.ne.s32.totalorder %s37, %s51
    %p53 = scmp.eq.s32.totalorder %s20, 0
    %p54 = por %p52, %p53
    %s55 = smul.u32 %s21, 3
    %s56 = sadd.s32 %s55, %s22
    %s57 = smul.u32 %s33, 3
    %s58 = sadd.s32 %s57, %s29
    %s59 = ssub.s32 %s56, %s58
    %p60 = scmp.eq.s32.totalorder %s59, 0
    %s62 = sadd.s32 %s61, 1
    %s63 = scalar_select %p60, %s61, %s62
    %p66 = pneg %p60
    %p67 = scmp.eq.s32.totalorder %s14, 5
    %p68 = por %p66, %p67
    %p69 = scmp.ne.s32.totalorder %s61, %s64
    %p70 = scmp.eq.s32.totalorder %s14, 0
    %p71 = por %p69, %p70
    %p72 = scmp.ne.s32.totalorder %s61, %s64
    %p73 = scmp.eq.s32.totalorder %s19, 5
    %p74 = por %p72, %p73
    %p75 = scmp.ne.s32.totalorder %s64, %s65
    %p76 = scmp.eq.s32.totalorder %s19, 0
    %p77 = por %p75, %p76
    %p78 = scmp.ne.s32.totalorder %s64, %s65
    %p79 = scmp.eq.s32.totalorder %s20, 5
    %p80 = por %p78, %p79
    %p82 = scmp.ne.s32.totalorder %s65, %s81
    %p83 = scmp.eq.s32.totalorder %s20, 0
    %p84 = por %p82, %p83
    %s85 = smul.u32 %s21, 3
    %s86 = sadd.s32 %s85, %s22
    %s87 = smul.u32 %s33, 3
    %s88 = sadd.s32 %s87, %s29
    %s89 = ssub.s32 %s86, %s88
    %p90 = scmp.eq.s32.totalorder %s89, 0
    %s92 = sadd.s32 %s91, 1
    %s93 = scalar_select %p90, %s91, %s92
    %p96 = pneg %p90
    %p97 = scmp.eq.s32.totalorder %s14, 5
    %p98 = por %p96, %p97
    %p99 = scmp.ne.s32.totalorder %s91, %s94
    %p100 = scmp.eq.s32.totalorder %s14, 0
    %p101 = por %p99, %p100
    %p102 = scmp.ne.s32.totalorder %s91, %s94
    %p103 = scmp.eq.s32.totalorder %s19, 5
    %p104 = por %p102, %p103
    %p105 = scmp.ne.s32.totalorder %s94, %s95
    %p106 = scmp.eq.s32.totalorder %s19, 0
    %p107 = por %p105, %p106
    %p108 = scmp.ne.s32.totalorder %s94, %s95
    %p109 = scmp.eq.s32.totalorder %s20, 5
    %p110 = por %p108, %p109
    %p112 = scmp.ne.s32.totalorder %s95, %s111
    %p113 = scmp.eq.s32.totalorder %s20, 0
    %p114 = por %p112, %p113
    %s115 = smul.u32 %s21, 3
    %s116 = sadd.s32 %s115, %s22
    %s117 = smul.u32 %s33, 3
    %s118 = sadd.s32 %s117, %s29
    %s119 = ssub.s32 %s116, %s118
    %p120 = scmp.eq.s32.totalorder %s119, 0
    %s122 = sadd.s32 %s121, 1
    %s123 = scalar_select %p120, %s121, %s122
    %p126 = pneg %p120
    %p127 = scmp.eq.s32.totalorder %s14, 5
    %p128 = por %p126, %p127
    %p129 = scmp.ne.s32.totalorder %s121, %s124
    %p130 = scmp.eq.s32.totalorder %s14, 0
    %p131 = por %p129, %p130
    %p132 = scmp.ne.s32.totalorder %s121, %s124
    %p133 = scmp.eq.s32.totalorder %s19, 5
    %p134 = por %p132, %p133
    %p135 = scmp.ne.s32.totalorder %s124, %s125
    %p136 = scmp.eq.s32.totalorder %s19, 0
    %p137 = por %p135, %p136
    %p138 = scmp.ne.s32.totalorder %s124, %s125
    %p139 = scmp.eq.s32.totalorder %s20, 5
    %p140 = por %p138, %p139
    %p142 = scmp.ne.s32.totalorder %s125, %s141
    %p143 = scmp.eq.s32.totalorder %s20, 0
    %p144 = por %p142, %p143
    %s145 = ssub.s32 %s21, %s33
    %p146 = scmp.eq.s32.totalorder %s145, 0
    %s148 = sadd.s32 %s147, 1
    %s149 = scalar_select %p146, %s147, %s148
    %p152 = pneg %p146
    %p153 = scmp.eq.s32.totalorder %s14, 5
    %p154 = por %p152, %p153
    %p155 = scmp.ne.s32.totalorder %s147, %s150
    %p156 = scmp.eq.s32.totalorder %s14, 0
    %p157 = por %p155, %p156
    %p158 = scmp.ne.s32.totalorder %s147, %s150
    %p159 = scmp.eq.s32.totalorder %s19, 5
    %p160 = por %p158, %p159
    %p161 = scmp.ne.s32.totalorder %s150, %s151
    %p162 = scmp.eq.s32.totalorder %s19, 0
    %p163 = por %p161, %p162
    %p164 = scmp.ne.s32.totalorder %s150, %s151
    %p165 = scmp.eq.s32.totalorder %s20, 5
    %p166 = por %p164, %p165
    %p168 = scmp.ne.s32.totalorder %s151, %s167
    %p169 = scmp.eq.s32.totalorder %s20, 0
    %p170 = por %p168, %p169
    %s171 = ssub.s32 %s21, %s33
    %p172 = scmp.eq.s32.totalorder %s171, 0
    %s174 = sadd.s32 %s173, 1
    %s175 = scalar_select %p172, %s173, %s174
    %p178 = pneg %p172
    %p179 = scmp.eq.s32.totalorder %s14, 5
    %p180 = por %p178, %p179
    %p181 = scmp.ne.s32.totalorder %s173, %s176
    %p182 = scmp.eq.s32.totalorder %s14, 0
    %p183 = por %p181, %p182
    %p184 = scmp.ne.s32.totalorder %s173, %s176
    %p185 = scmp.eq.s32.totalorder %s19, 5
    %p186 = por %p184, %p185
    %p187 = scmp.ne.s32.totalorder %s176, %s177
    %p188 = scmp.eq.s32.totalorder %s19, 0
    %p189 = por %p187, %p188
    %p190 = scmp.ne.s32.totalorder %s176, %s177
    %p191 = scmp.eq.s32.totalorder %s20, 5
    %p192 = por %p190, %p191
    %p194 = scmp.ne.s32.totalorder %s177, %s193
    %p195 = scmp.eq.s32.totalorder %s20, 0
    %p196 = por %p194, %p195
    %s197 = ssub.s32 %s21, %s33
    %p198 = scmp.eq.s32.totalorder %s197, 0
    %s200 = sadd.s32 %s199, 1
    %s201 = scalar_select %p198, %s199, %s200
    %p204 = pneg %p198
    %p205 = scmp.eq.s32.totalorder %s14, 5
    %p206 = por %p204, %p205
    %p207 = scmp.ne.s32.totalorder %s199, %s202
    %p208 = scmp.eq.s32.totalorder %s14, 0
    %p209 = por %p207, %p208
    %p210 = scmp.ne.s32.totalorder %s199, %s202
    %p211 = scmp.eq.s32.totalorder %s19, 5
    %p212 = por %p210, %p211
    %p213 = scmp.ne.s32.totalorder %s202, %s203
    %p214 = scmp.eq.s32.totalorder %s19, 0
    %p215 = por %p213, %p214
    %p216 = scmp.ne.s32.totalorder %s202, %s203
    %p217 = scmp.eq.s32.totalorder %s20, 5
    %p218 = por %p216, %p217
    %p220 = scmp.ne.s32.totalorder %s203, %s219
    %p221 = scmp.eq.s32.totalorder %s20, 0
    %p222 = por %p220, %p221
    %s223 = ssub.s32 %s21, %s33
    %p224 = scmp.eq.s32.totalorder %s223, 0
    %s226 = sadd.s32 %s225, 1
    %s227 = scalar_select %p224, %s225, %s226
    %p230 = pneg %p224
    %p231 = scmp.eq.s32.totalorder %s14, 5
    %p232 = por %p230, %p231
    %p233 = scmp.ne.s32.totalorder %s225, %s228
    %p234 = scmp.eq.s32.totalorder %s14, 0
    %p235 = por %p233, %p234
    %p236 = scmp.ne.s32.totalorder %s225, %s228
    %p237 = scmp.eq.s32.totalorder %s19, 5
    %p238 = por %p236, %p237
    %p239 = scmp.ne.s32.totalorder %s228, %s229
    %p240 = scmp.eq.s32.totalorder %s19, 0
    %p241 = por %p239, %p240
    %p242 = scmp.ne.s32.totalorder %s228, %s229
    %p243 = scmp.eq.s32.totalorder %s20, 5
    %p244 = por %p242, %p243
    %p246 = scmp.ne.s32.totalorder %s229, %s245
    %p247 = scmp.eq.s32.totalorder %s20, 0
    %p248 = por %p246, %p247
    %p249 = scmp.le.s32.totalorder 1, %s14
    %p250 = scmp.lt.s32.totalorder %s14, 7
    %p251 = pnand %p249, %p250
    %p252 = pneg %p251
    // Predicated region
    $region9: #{tpu_custom_call.1} parent=5 // pred_check
      _
    $region10: #{tpu_custom_call.1} parent=5 // pred_check_branch
      %254 = sbr.rel (%p251) target = $region12
    $region11: #{tpu_custom_call.1} parent=5 // pred_region
      %s255 = ssub.s32 %s14, 1
      // Predicated region
      $region13: #{tpu_custom_call.1} parent=11 // pred_check
        %p256 = pneg %p47
      $region14: #{tpu_custom_call.1} parent=11 // pred_check_branch
        %258 = sbr.rel (%p256) target = $region16
      $region15: #{tpu_custom_call.1} parent=11 // pred_region
        _
      $region16: #{tpu_custom_call.1} parent=11 // pred_fallthru
        _
    $region12: #{tpu_custom_call.1} parent=5 // pred_fallthru
      _
    %p259 = scmp.lt.s32.totalorder %s14, 6
    // Predicated region
    $region17: #{tpu_custom_call.1} parent=5 // pred_check
      %p260 = pneg %p259
    $region18: #{tpu_custom_call.1} parent=5 // pred_check_branch
      %262 = sbr.rel (%p260) target = $region20
    $region19: #{tpu_custom_call.1} parent=5 // pred_region
      // Predicated region
      $region21: #{tpu_custom_call.1} parent=19 // pred_check
        %p263 = pneg %p71
      $region22: #{tpu_custom_call.1} parent=19 // pred_check_branch
        %265 = sbr.rel (%p263) target = $region24
      $region23: #{tpu_custom_call.1} parent=19 // pred_region
        %s266 = smul.u32 %s21, 3
        %s267 = sadd.s32 %s266, %s22
        %s268 = smul.u32 8, %s267
        %p269 = scmp.lt.s32.totalorder %s268, 47
        %s270 = scalar_select %p269, %s268, 47
        %s271 = smul.addr %s270, 8
        %s272 = scalar_lea.vmem %s1, %s271
        %s273 = smul.u32 %s21, 3
        %s274 = sadd.s32 %s273, %s22
        %s275 = smul.u32 8, %s274
      $region24: #{tpu_custom_call.1} parent=19 // pred_fallthru
        _
      // Predicated region
      $region25: #{tpu_custom_call.1} parent=19 // pred_check
        %p276 = pneg %p101
      $region26: #{tpu_custom_call.1} parent=19 // pred_check_branch
        %278 = sbr.rel (%p276) target = $region28
      $region27: #{tpu_custom_call.1} parent=19 // pred_region
        %s279 = smul.u32 %s21, 3
        %s280 = sadd.s32 %s279, %s22
        %s281 = smul.u32 8, %s280
        %p282 = scmp.lt.s32.totalorder %s281, 47
        %s283 = scalar_select %p282, %s281, 47
        %s284 = smul.addr %s283, 8
        %s285 = scalar_lea.vmem %s2, %s284
        %s286 = smul.u32 %s21, 3
        %s287 = sadd.s32 %s286, %s22
        %s288 = smul.u32 8, %s287
      $region28: #{tpu_custom_call.1} parent=19 // pred_fallthru
        _
      // Predicated region
      $region29: #{tpu_custom_call.1} parent=19 // pred_check
        %p289 = pneg %p131
      $region30: #{tpu_custom_call.1} parent=19 // pred_check_branch
        %291 = sbr.rel (%p289) target = $region32
      $region31: #{tpu_custom_call.1} parent=19 // pred_region
        %s292 = smul.u32 %s21, 3
        %s293 = sadd.s32 %s292, %s22
        %s294 = smul.u32 8, %s293
        %p295 = scmp.lt.s32.totalorder %s294, 47
        %s296 = scalar_select %p295, %s294, 47
        %s297 = smul.addr %s296, 8
        %s298 = scalar_lea.vmem %s3, %s297
        %s299 = smul.u32 %s21, 3
        %s300 = sadd.s32 %s299, %s22
        %s301 = smul.u32 8, %s300
      $region32: #{tpu_custom_call.1} parent=19 // pred_fallthru
        _
    $region20: #{tpu_custom_call.1} parent=5 // pred_fallthru
      _
    %p302 = scmp.le.s32.totalorder 1, %s14
    %p303 = scmp.lt.s32.totalorder %s14, 7
    %p304 = pnand %p302, %p303
    %p305 = pneg %p304
    // Predicated region
    $region33: #{tpu_custom_call.1} parent=5 // pred_check
      _
    $region34: #{tpu_custom_call.1} parent=5 // pred_check_branch
      %307 = sbr.rel (%p304) target = $region36
    $region35: #{tpu_custom_call.1} parent=5 // pred_region
      %s308 = ssub.s32 %s14, 1
      %p309 = pneg %p47
      %p310 = pneg %p44
      %s311 = smul.u32 %s23, 3
      %s312 = sadd.s32 %s311, %s24
      %s313 = smul.u32 8, %s312
      %p314 = scmp.lt.s32.totalorder %s313, 47
      %s315 = scalar_select %p314, %s313, 47
      %s316 = smul.addr %s315, 8
      %s317 = scalar_lea.vmem %s1, %s316
      %p318 = pneg %p77
      %p319 = pneg %p74
      %s320 = smul.u32 %s23, 3
      %s321 = sadd.s32 %s320, %s24
      %s322 = smul.u32 8, %s321
      %p323 = scmp.lt.s32.totalorder %s322, 47
      %s324 = scalar_select %p323, %s322, 47
      %s325 = smul.addr %s324, 8
      %s326 = scalar_lea.vmem %s2, %s325
      %p327 = pneg %p107
      %p328 = pneg %p104
      %s329 = smul.u32 %s23, 3
      %s330 = sadd.s32 %s329, %s24
      %s331 = smul.u32 8, %s330
      %p332 = scmp.lt.s32.totalorder %s331, 47
      %s333 = scalar_select %p332, %s331, 47
      %s334 = smul.addr %s333, 8
      %s335 = scalar_lea.vmem %s3, %s334
      %p336 = pneg %p137
      %p337 = pneg %p134
      %p338 = pneg %p163
      %p339 = pneg %p160
      %p340 = scmp.lt.s32.totalorder %s23, 1
      %s341 = scalar_select %p340, %s23, 1
      %s342 = scalar_lea.vmem %s4, %s341
      %p343 = pneg %p189
      %p344 = pneg %p186
      %p345 = scmp.lt.s32.totalorder %s23, 1
      %s346 = scalar_select %p345, %s23, 1
      %s347 = scalar_lea.vmem %s5, %s346
      %p348 = pneg %p215
      %p349 = pneg %p212
      %p350 = scmp.lt.s32.totalorder %s23, 1
      %s351 = scalar_select %p350, %s23, 1
      %s352 = scalar_lea.vmem %s6, %s351
      %p353 = pneg %p241
      %p354 = pneg %p238
      %p355 = scmp.lt.s32.totalorder %s23, 1
      %s356 = scalar_select %p355, %s23, 1
      %s357 = scalar_lea.vmem %s7, %s356
      %s358 = smul.u32 %s23, 3
      %s359 = sadd.s32 %s358, %s24
      %s360 = smul.u32 8, %s359
      %p361 = scmp.lt.s32.totalorder %s360, 47
      %s362 = scalar_select %p361, %s360, 47
      %s363 = smul.addr %s362, 8
      %s364 = scalar_lea.vmem %s1, %s363
      %s365 = smul.u32 %s23, 3
      %s366 = sadd.s32 %s365, %s24
      %s367 = smul.u32 8, %s366
      %s368 = smul.u32 %s23, 3
      %s369 = sadd.s32 %s368, %s24
      %s370 = smul.u32 8, %s369
      %p371 = scmp.lt.s32.totalorder %s370, 47
      %s372 = scalar_select %p371, %s370, 47
      %s373 = smul.addr %s372, 8
      %s374 = scalar_lea.vmem %s2, %s373
      %s375 = smul.u32 %s23, 3
      %s376 = sadd.s32 %s375, %s24
      %s377 = smul.u32 8, %s376
      %s378 = smul.u32 %s23, 3
      %s379 = sadd.s32 %s378, %s24
      %s380 = smul.u32 8, %s379
      %p381 = scmp.lt.s32.totalorder %s380, 47
      %s382 = scalar_select %p381, %s380, 47
      %s383 = smul.addr %s382, 8
      %s384 = scalar_lea.vmem %s3, %s383
      %s385 = smul.u32 %s23, 3
      %s386 = sadd.s32 %s385, %s24
      %s387 = smul.u32 8, %s386
      %p388 = scmp.lt.s32.totalorder %s23, 1
      %s389 = scalar_select %p388, %s23, 1
      %s390 = scalar_lea.vmem %s4, %s389
      %p391 = scmp.lt.s32.totalorder %s23, 1
      %s392 = scalar_select %p391, %s23, 1
      %s393 = scalar_lea.vmem %s5, %s392
      %p394 = scmp.lt.s32.totalorder %s23, 1
      %s395 = scalar_select %p394, %s23, 1
      %s396 = scalar_lea.vmem %s6, %s395
      %p397 = scmp.lt.s32.totalorder %s23, 1
      %s398 = scalar_select %p397, %s23, 1
      %s399 = scalar_lea.vmem %s7, %s398
      %p400 = scmp.eq.s32.totalorder %s24, 0
      // Predicated region
      $region37: #{tpu_custom_call.1} parent=35 // pred_check
        %p401 = pneg %p400
      $region38: #{tpu_custom_call.1} parent=35 // pred_check_branch
        %403 = sbr.rel (%p401) target = $region40
      $region39: #{tpu_custom_call.1} parent=35 // pred_region
        %vm404 = vcmask 0
        %405 = vst.msk [vmem:[%s390] sm:$0x1] %vm404, 0.0
        %406 = vst.msk [vmem:[%s393] sm:$0x1] %vm404, 0.0
        %407 = vst.msk [vmem:[%s396] sm:$0x1] %vm404, 0.0
        %408 = vst.msk [vmem:[%s399] sm:$0x1] %vm404, 0.0
      $region40: #{tpu_custom_call.1} parent=35 // pred_fallthru
        _
      %v409 = vld [vmem:[%s0] sm:$0xff]
      %v410 = vld [vmem:[%s0 + $0x8] sm:$0xff]
      %v411 = vlaneseq
      %v412 = vand.u32 %v411, 127
      %v413 = vld [vmem:[%s364] sm:$0xff]
      %v414 = vld [vmem:[%s364 + $0x8] sm:$0xff]
      %v415 = vld [vmem:[%s364 + $0x10] sm:$0xff]
      %v416 = vld [vmem:[%s364 + $0x18] sm:$0xff]
      %v417 = vld [vmem:[%s364 + $0x20] sm:$0xff]
      %v418 = vld [vmem:[%s364 + $0x28] sm:$0xff]
      %v419 = vld [vmem:[%s364 + $0x30] sm:$0xff]
      %v420 = vld [vmem:[%s364 + $0x38] sm:$0xff]
      %421 = vset.pattern.permute.xlu0 0
      %422 = vperm.xlu0 %421, %v413
      %v423 = vpop.permute.xlu0 %422
      %424 = vset.pattern.permute.xlu0 0
      %425 = vperm.xlu0 %424, %v414
      %v426 = vpop.permute.xlu0 %425
      %427 = vset.pattern.permute.xlu0 0
      %428 = vperm.xlu0 %427, %v415
      %v429 = vpop.permute.xlu0 %428
      %430 = vset.pattern.permute.xlu0 0
      %431 = vperm.xlu0 %430, %v416
      %v432 = vpop.permute.xlu0 %431
      %433 = vset.pattern.permute.xlu0 0
      %434 = vperm.xlu0 %433, %v417
      %v435 = vpop.permute.xlu0 %434
      %436 = vset.pattern.permute.xlu0 0
      %437 = vperm.xlu0 %436, %v418
      %v438 = vpop.permute.xlu0 %437
      %439 = vset.pattern.permute.xlu0 0
      %440 = vperm.xlu0 %439, %v419
      %v441 = vpop.permute.xlu0 %440
      %442 = vset.pattern.permute.xlu0 0
      %443 = vperm.xlu0 %442, %v420
      %v444 = vpop.permute.xlu0 %443
      %vm445 = vcmp.eq.s32.totalorder %v423, %v412
      %vm446 = vcmp.eq.s32.totalorder %v426, %v412
      %vm447 = vcmp.eq.s32.totalorder %v429, %v412
      %vm448 = vcmp.eq.s32.totalorder %v432, %v412
      %vm449 = vcmp.eq.s32.totalorder %v435, %v412
      %vm450 = vcmp.eq.s32.totalorder %v438, %v412
      %vm451 = vcmp.eq.s32.totalorder %v441, %v412
      %vm452 = vcmp.eq.s32.totalorder %v444, %v412
      %v453 = vsel %vm445, 1.0, 0.0
      %v454 = vsel %vm446, 1.0, 0.0
      %v455 = vsel %vm447, 1.0, 0.0
      %v456 = vsel %vm448, 1.0, 0.0
      %v457 = vsel %vm449, 1.0, 0.0
      %v458 = vsel %vm450, 1.0, 0.0
      %v459 = vsel %vm451, 1.0, 0.0
      %v460 = vsel %vm452, 1.0, 0.0
      %vm461 = vcmask 130048
      %v463 = vsel %vm461, %v453, 0
      %v466 = vsel %vm461, %v454, 0
      %v469 = vsel %vm461, %v455, 0
      %v472 = vsel %vm461, %v456, 0
      %v475 = vsel %vm461, %v457, 0
      %v478 = vsel %vm461, %v458, 0
      %v481 = vsel %vm461, %v459, 0
      %v484 = vsel %vm461, %v460, 0
      %486 = vmatprep.subr.mxu0 0.0
      %487 = vmatpush1.msra.mxu0 0.0
      %488 = vmatprep.subr.mxu0 0.0
      %489 = vmatpush1.msra.mxu0 0.0
      %490 = vmatprep.subr.mxu0 0.0
      %491 = vmatpush1.msra.mxu0 0.0
      %492 = vmatprep.subr.mxu0 0.0
      %493 = vmatpush1.msra.mxu0 0.0
      %494 = vmatprep.subr.mxu0 0.0
      %495 = vmatpush1.msra.mxu0 0.0
      %496 = vmatprep.subr.mxu0 0.0
      %497 = vmatpush1.msra.mxu0 0.0
      %498 = vmatprep.subr.mxu0 0.0
      %499 = vmatpush1.msra.mxu0 0.0
      %500 = vmatprep.subr.mxu0 0.0
      %501 = vmatpush1.msra.mxu0 0.0
      %502 = vmatprep.subr.mxu0 0.0
      %503 = vmatpush1.msra.mxu0 0.0
      %504 = vmatprep.subr.mxu0 0.0
      %505 = vmatpush1.msra.mxu0 0.0
      %506 = vmatprep.subr.mxu0 0.0
      %507 = vmatpush1.msra.mxu0 0.0
      %508 = vmatprep.subr.mxu0 0.0
      %509 = vmatpush1.msra.mxu0 0.0
      %510 = vmatprep.subr.mxu0 0.0
      %511 = vmatpush1.msra.mxu0 0.0
      %512 = vmatprep.subr.mxu0 0.0
      %513 = vmatpush1.msra.mxu0 0.0
      %514 = vmatprep.subr.mxu0 0.0
      %515 = vmatpush1.msra.mxu0 %v410
      %516 = vmatprep.subr.mxu0 0.0
      %517 = vmatpush1.msra.mxu0 %v409
      %518 = vmatprep.subr.mxu0 0.0
      %519 = vmatpush2.msra.mxu0 0.0
      %520 = vmatprep.subr.mxu0 0.0
      %521 = vmatpush2.msra.mxu0 0.0
      %522 = vmatprep.subr.mxu0 0.0
      %523 = vmatpush2.msra.mxu0 0.0
      %524 = vmatprep.subr.mxu0 0.0
      %525 = vmatpush2.msra.mxu0 0.0
      %526 = vmatprep.subr.mxu0 0.0
      %527 = vmatpush2.msra.mxu0 0.0
      %528 = vmatprep.subr.mxu0 0.0
      %529 = vmatpush2.msra.mxu0 0.0
      %530 = vmatprep.subr.mxu0 0.0
      %531 = vmatpush2.msra.mxu0 0.0
      %532 = vmatprep.subr.mxu0 0.0
      %533 = vmatpush2.msra.mxu0 0.0
      %534 = vmatprep.subr.mxu0 0.0
      %535 = vmatpush2.msra.mxu0 0.0
      %536 = vmatprep.subr.mxu0 0.0
      %537 = vmatpush2.msra.mxu0 0.0
      %538 = vmatprep.subr.mxu0 0.0
      %539 = vmatpush2.msra.mxu0 0.0
      %540 = vmatprep.subr.mxu0 0.0
      %541 = vmatpush2.msra.mxu0 0.0
      %542 = vmatprep.subr.mxu0 0.0
      %543 = vmatpush2.msra.mxu0 0.0
      %544 = vmatprep.subr.mxu0 0.0
      %545 = vmatpush2.msra.mxu0 0.0
      %546 = vmatprep.subr.mxu0 0.0
      %547 = vmatpush2.msra.mxu0 0.0
      %548 = vmatprep.subr.mxu0 0.0
      %549 = vmatpush2.msra.mxu0 0.0
      %550 = vmatprep.mubr.f32.mxu0 0.0
      %551 = vmatmul.mubr.f32.gmra.mxu0 %v463
      %v552 = vpop.f32.mrf.mxu0
      %v553 = vadd.f32 0.0, %v552
      %v554 = vpop.f32.mrf.mxu0
      %555 = vmatprep.mubr.f32.mxu0 0.0
      %556 = vmatmul.mubr.f32.gmra.mxu0 %v466
      %v557 = vpop.f32.mrf.mxu0
      %v558 = vadd.f32 0.0, %v557
      %v559 = vpop.f32.mrf.mxu0
      %560 = vmatprep.mubr.f32.mxu0 0.0
      %561 = vmatmul.mubr.f32.gmra.mxu0 %v469
      %v562 = vpop.f32.mrf.mxu0
      %v563 = vadd.f32 0.0, %v562
      %v564 = vpop.f32.mrf.mxu0
      %565 = vmatprep.mubr.f32.mxu0 0.0
      %566 = vmatmul.mubr.f32.gmra.mxu0 %v472
      %v567 = vpop.f32.mrf.mxu0
      %v568 = vadd.f32 0.0, %v567
      %v569 = vpop.f32.mrf.mxu0
      %570 = vmatprep.mubr.f32.mxu0 0.0
      %571 = vmatmul.mubr.f32.gmra.mxu0 %v475
      %v572 = vpop.f32.mrf.mxu0
      %v573 = vadd.f32 0.0, %v572
      %v574 = vpop.f32.mrf.mxu0
      %575 = vmatprep.mubr.f32.mxu0 0.0
      %576 = vmatmul.mubr.f32.gmra.mxu0 %v478
      %v577 = vpop.f32.mrf.mxu0
      %v578 = vadd.f32 0.0, %v577
      %v579 = vpop.f32.mrf.mxu0
      %580 = vmatprep.mubr.f32.mxu0 0.0
      %581 = vmatmul.mubr.f32.gmra.mxu0 %v481
      %v582 = vpop.f32.mrf.mxu0
      %v583 = vadd.f32 0.0, %v582
      %v584 = vpop.f32.mrf.mxu0
      %585 = vmatprep.mubr.f32.mxu0 0.0
      %586 = vmatmul.mubr.f32.gmra.mxu0 %v484
      %v587 = vpop.f32.mrf.mxu0
      %v588 = vadd.f32 0.0, %v587
      %v589 = vpop.f32.mrf.mxu0
      %590 = vdwg.mxu0
      %v591 = vld [vmem:[%s374] sm:$0xff]
      %v592 = vld [vmem:[%s374 + $0x8] sm:$0xff]
      %v593 = vld [vmem:[%s374 + $0x10] sm:$0xff]
      %v594 = vld [vmem:[%s374 + $0x18] sm:$0xff]
      %v595 = vld [vmem:[%s374 + $0x20] sm:$0xff]
      %v596 = vld [vmem:[%s374 + $0x28] sm:$0xff]
      %v597 = vld [vmem:[%s374 + $0x30] sm:$0xff]
      %v598 = vld [vmem:[%s374 + $0x38] sm:$0xff]
      %599 = vset.pattern.permute.xlu0 0
      %600 = vperm.xlu0 %599, %v591
      %v601 = vpop.permute.xlu0 %600
      %602 = vset.pattern.permute.xlu0 0
      %603 = vperm.xlu0 %602, %v592
      %v604 = vpop.permute.xlu0 %603
      %605 = vset.pattern.permute.xlu0 0
      %606 = vperm.xlu0 %605, %v593
      %v607 = vpop.permute.xlu0 %606
      %608 = vset.pattern.permute.xlu0 0
      %609 = vperm.xlu0 %608, %v594
      %v610 = vpop.permute.xlu0 %609
      %611 = vset.pattern.permute.xlu0 0
      %612 = vperm.xlu0 %611, %v595
      %v613 = vpop.permute.xlu0 %612
      %614 = vset.pattern.permute.xlu0 0
      %615 = vperm.xlu0 %614, %v596
      %v616 = vpop.permute.xlu0 %615
      %617 = vset.pattern.permute.xlu0 0
      %618 = vperm.xlu0 %617, %v597
      %v619 = vpop.permute.xlu0 %618
      %620 = vset.pattern.permute.xlu0 0
      %621 = vperm.xlu0 %620, %v598
      %v622 = vpop.permute.xlu0 %621
      %vm623 = vcmp.eq.s32.totalorder %v601, %v412
      %vm624 = vcmp.eq.s32.totalorder %v604, %v412
      %vm625 = vcmp.eq.s32.totalorder %v607, %v412
      %vm626 = vcmp.eq.s32.totalorder %v610, %v412
      %vm627 = vcmp.eq.s32.totalorder %v613, %v412
      %vm628 = vcmp.eq.s32.totalorder %v616, %v412
      %vm629 = vcmp.eq.s32.totalorder %v619, %v412
      %vm630 = vcmp.eq.s32.totalorder %v622, %v412
      %v631 = vsel %vm623, 1.0, 0.0
      %v632 = vsel %vm624, 1.0, 0.0
      %v633 = vsel %vm625, 1.0, 0.0
      %v634 = vsel %vm626, 1.0, 0.0
      %v635 = vsel %vm627, 1.0, 0.0
      %v636 = vsel %vm628, 1.0, 0.0
      %v637 = vsel %vm629, 1.0, 0.0
      %v638 = vsel %vm630, 1.0, 0.0
      %v640 = vsel %vm461, %v631, 0
      %v643 = vsel %vm461, %v632, 0
      %v646 = vsel %vm461, %v633, 0
      %v649 = vsel %vm461, %v634, 0
      %v652 = vsel %vm461, %v635, 0
      %v655 = vsel %vm461, %v636, 0
      %v658 = vsel %vm461, %v637, 0
      %v661 = vsel %vm461, %v638, 0
      %663 = vmatprep.subr.mxu0 0.0
      %664 = vmatpush1.msra.mxu0 0.0
      %665 = vmatprep.subr.mxu0 0.0
      %666 = vmatpush1.msra.mxu0 0.0
      %667 = vmatprep.subr.mxu0 0.0
      %668 = vmatpush1.msra.mxu0 0.0
      %669 = vmatprep.subr.mxu0 0.0
      %670 = vmatpush1.msra.mxu0 0.0
      %671 = vmatprep.subr.mxu0 0.0
      %672 = vmatpush1.msra.mxu0 0.0
      %673 = vmatprep.subr.mxu0 0.0
      %674 = vmatpush1.msra.mxu0 0.0
      %675 = vmatprep.subr.mxu0 0.0
      %676 = vmatpush1.msra.mxu0 0.0
      %677 = vmatprep.subr.mxu0 0.0
      %678 = vmatpush1.msra.mxu0 0.0
      %679 = vmatprep.subr.mxu0 0.0
      %680 = vmatpush1.msra.mxu0 0.0
      %681 = vmatprep.subr.mxu0 0.0
      %682 = vmatpush1.msra.mxu0 0.0
      %683 = vmatprep.subr.mxu0 0.0
      %684 = vmatpush1.msra.mxu0 0.0
      %685 = vmatprep.subr.mxu0 0.0
      %686 = vmatpush1.msra.mxu0 0.0
      %687 = vmatprep.subr.mxu0 0.0
      %688 = vmatpush1.msra.mxu0 0.0
      %689 = vmatprep.subr.mxu0 0.0
      %690 = vmatpush1.msra.mxu0 0.0
      %691 = vmatprep.subr.mxu0 0.0
      %692 = vmatpush1.msra.mxu0 %v410
      %693 = vmatprep.subr.mxu0 0.0
      %694 = vmatpush1.msra.mxu0 %v409
      %695 = vmatprep.subr.mxu0 0.0
      %696 = vmatpush2.msra.mxu0 0.0
      %697 = vmatprep.subr.mxu0 0.0
      %698 = vmatpush2.msra.mxu0 0.0
      %699 = vmatprep.subr.mxu0 0.0
      %700 = vmatpush2.msra.mxu0 0.0
      %701 = vmatprep.subr.mxu0 0.0
      %702 = vmatpush2.msra.mxu0 0.0
      %703 = vmatprep.subr.mxu0 0.0
      %704 = vmatpush2.msra.mxu0 0.0
      %705 = vmatprep.subr.mxu0 0.0
      %706 = vmatpush2.msra.mxu0 0.0
      %707 = vmatprep.subr.mxu0 0.0
      %708 = vmatpush2.msra.mxu0 0.0
      %709 = vmatprep.subr.mxu0 0.0
      %710 = vmatpush2.msra.mxu0 0.0
      %711 = vmatprep.subr.mxu0 0.0
      %712 = vmatpush2.msra.mxu0 0.0
      %713 = vmatprep.subr.mxu0 0.0
      %714 = vmatpush2.msra.mxu0 0.0
      %715 = vmatprep.subr.mxu0 0.0
      %716 = vmatpush2.msra.mxu0 0.0
      %717 = vmatprep.subr.mxu0 0.0
      %718 = vmatpush2.msra.mxu0 0.0
      %719 = vmatprep.subr.mxu0 0.0
      %720 = vmatpush2.msra.mxu0 0.0
      %721 = vmatprep.subr.mxu0 0.0
      %722 = vmatpush2.msra.mxu0 0.0
      %723 = vmatprep.subr.mxu0 0.0
      %724 = vmatpush2.msra.mxu0 0.0
      %725 = vmatprep.subr.mxu0 0.0
      %726 = vmatpush2.msra.mxu0 0.0
      %727 = vmatprep.mubr.f32.mxu0 0.0
      %728 = vmatmul.mubr.f32.gmra.mxu0 %v640
      %v729 = vpop.f32.mrf.mxu0
      %v730 = vadd.f32 0.0, %v729
      %v731 = vpop.f32.mrf.mxu0
      %732 = vmatprep.mubr.f32.mxu0 0.0
      %733 = vmatmul.mubr.f32.gmra.mxu0 %v643
      %v734 = vpop.f32.mrf.mxu0
      %v735 = vadd.f32 0.0, %v734
      %v736 = vpop.f32.mrf.mxu0
      %737 = vmatprep.mubr.f32.mxu0 0.0
      %738 = vmatmul.mubr.f32.gmra.mxu0 %v646
      %v739 = vpop.f32.mrf.mxu0
      %v740 = vadd.f32 0.0, %v739
      %v741 = vpop.f32.mrf.mxu0
      %742 = vmatprep.mubr.f32.mxu0 0.0
      %743 = vmatmul.mubr.f32.gmra.mxu0 %v649
      %v744 = vpop.f32.mrf.mxu0
      %v745 = vadd.f32 0.0, %v744
      %v746 = vpop.f32.mrf.mxu0
      %747 = vmatprep.mubr.f32.mxu0 0.0
      %748 = vmatmul.mubr.f32.gmra.mxu0 %v652
      %v749 = vpop.f32.mrf.mxu0
      %v750 = vadd.f32 0.0, %v749
      %v751 = vpop.f32.mrf.mxu0
      %752 = vmatprep.mubr.f32.mxu0 0.0
      %753 = vmatmul.mubr.f32.gmra.mxu0 %v655
      %v754 = vpop.f32.mrf.mxu0
      %v755 = vadd.f32 0.0, %v754
      %v756 = vpop.f32.mrf.mxu0
      %757 = vmatprep.mubr.f32.mxu0 0.0
      %758 = vmatmul.mubr.f32.gmra.mxu0 %v658
      %v759 = vpop.f32.mrf.mxu0
      %v760 = vadd.f32 0.0, %v759
      %v761 = vpop.f32.mrf.mxu0
      %762 = vmatprep.mubr.f32.mxu0 0.0
      %763 = vmatmul.mubr.f32.gmra.mxu0 %v661
      %v764 = vpop.f32.mrf.mxu0
      %v765 = vadd.f32 0.0, %v764
      %v766 = vpop.f32.mrf.mxu0
      %767 = vdwg.mxu0
      %v768 = vld [vmem:[%s384] sm:$0xff]
      %v769 = vld [vmem:[%s384 + $0x8] sm:$0xff]
      %v770 = vld [vmem:[%s384 + $0x10] sm:$0xff]
      %v771 = vld [vmem:[%s384 + $0x18] sm:$0xff]
      %v772 = vld [vmem:[%s384 + $0x20] sm:$0xff]
      %v773 = vld [vmem:[%s384 + $0x28] sm:$0xff]
      %v774 = vld [vmem:[%s384 + $0x30] sm:$0xff]
      %v775 = vld [vmem:[%s384 + $0x38] sm:$0xff]
      %776 = vset.pattern.permute.xlu0 0
      %777 = vperm.xlu0 %776, %v768
      %v778 = vpop.permute.xlu0 %777
      %779 = vset.pattern.permute.xlu0 0
      %780 = vperm.xlu0 %779, %v769
      %v781 = vpop.permute.xlu0 %780
      %782 = vset.pattern.permute.xlu0 0
      %783 = vperm.xlu0 %782, %v770
      %v784 = vpop.permute.xlu0 %783
      %785 = vset.pattern.permute.xlu0 0
      %786 = vperm.xlu0 %785, %v771
      %v787 = vpop.permute.xlu0 %786
      %788 = vset.pattern.permute.xlu0 0
      %789 = vperm.xlu0 %788, %v772
      %v790 = vpop.permute.xlu0 %789
      %791 = vset.pattern.permute.xlu0 0
      %792 = vperm.xlu0 %791, %v773
      %v793 = vpop.permute.xlu0 %792
      %794 = vset.pattern.permute.xlu0 0
      %795 = vperm.xlu0 %794, %v774
      %v796 = vpop.permute.xlu0 %795
      %797 = vset.pattern.permute.xlu0 0
      %798 = vperm.xlu0 %797, %v775
      %v799 = vpop.permute.xlu0 %798
      %vm800 = vcmp.eq.s32.totalorder %v778, %v412
      %vm801 = vcmp.eq.s32.totalorder %v781, %v412
      %vm802 = vcmp.eq.s32.totalorder %v784, %v412
      %vm803 = vcmp.eq.s32.totalorder %v787, %v412
      %vm804 = vcmp.eq.s32.totalorder %v790, %v412
      %vm805 = vcmp.eq.s32.totalorder %v793, %v412
      %vm806 = vcmp.eq.s32.totalorder %v796, %v412
      %vm807 = vcmp.eq.s32.totalorder %v799, %v412
      %v808 = vsel %vm800, 1.0, 0.0
      %v809 = vsel %vm801, 1.0, 0.0
      %v810 = vsel %vm802, 1.0, 0.0
      %v811 = vsel %vm803, 1.0, 0.0
      %v812 = vsel %vm804, 1.0, 0.0
      %v813 = vsel %vm805, 1.0, 0.0
      %v814 = vsel %vm806, 1.0, 0.0
      %v815 = vsel %vm807, 1.0, 0.0
      %v817 = vsel %vm461, %v808, 0
      %v820 = vsel %vm461, %v809, 0
      %v823 = vsel %vm461, %v810, 0
      %v826 = vsel %vm461, %v811, 0
      %v829 = vsel %vm461, %v812, 0
      %v832 = vsel %vm461, %v813, 0
      %v835 = vsel %vm461, %v814, 0
      %v838 = vsel %vm461, %v815, 0
      %840 = vmatprep.subr.mxu0 0.0
      %841 = vmatpush1.msra.mxu0 0.0
      %842 = vmatprep.subr.mxu0 0.0
      %843 = vmatpush1.msra.mxu0 0.0
      %844 = vmatprep.subr.mxu0 0.0
      %845 = vmatpush1.msra.mxu0 0.0
      %846 = vmatprep.subr.mxu0 0.0
      %847 = vmatpush1.msra.mxu0 0.0
      %848 = vmatprep.subr.mxu0 0.0
      %849 = vmatpush1.msra.mxu0 0.0
      %850 = vmatprep.subr.mxu0 0.0
      %851 = vmatpush1.msra.mxu0 0.0
      %852 = vmatprep.subr.mxu0 0.0
      %853 = vmatpush1.msra.mxu0 0.0
      %854 = vmatprep.subr.mxu0 0.0
      %855 = vmatpush1.msra.mxu0 0.0
      %856 = vmatprep.subr.mxu0 0.0
      %857 = vmatpush1.msra.mxu0 0.0
      %858 = vmatprep.subr.mxu0 0.0
      %859 = vmatpush1.msra.mxu0 0.0
      %860 = vmatprep.subr.mxu0 0.0
      %861 = vmatpush1.msra.mxu0 0.0
      %862 = vmatprep.subr.mxu0 0.0
      %863 = vmatpush1.msra.mxu0 0.0
      %864 = vmatprep.subr.mxu0 0.0
      %865 = vmatpush1.msra.mxu0 0.0
      %866 = vmatprep.subr.mxu0 0.0
      %867 = vmatpush1.msra.mxu0 0.0
      %868 = vmatprep.subr.mxu0 0.0
      %869 = vmatpush1.msra.mxu0 %v410
      %870 = vmatprep.subr.mxu0 0.0
      %871 = vmatpush1.msra.mxu0 %v409
      %872 = vmatprep.subr.mxu0 0.0
      %873 = vmatpush2.msra.mxu0 0.0
      %874 = vmatprep.subr.mxu0 0.0
      %875 = vmatpush2.msra.mxu0 0.0
      %876 = vmatprep.subr.mxu0 0.0
      %877 = vmatpush2.msra.mxu0 0.0
      %878 = vmatprep.subr.mxu0 0.0
      %879 = vmatpush2.msra.mxu0 0.0
      %880 = vmatprep.subr.mxu0 0.0
      %881 = vmatpush2.msra.mxu0 0.0
      %882 = vmatprep.subr.mxu0 0.0
      %883 = vmatpush2.msra.mxu0 0.0
      %884 = vmatprep.subr.mxu0 0.0
      %885 = vmatpush2.msra.mxu0 0.0
      %886 = vmatprep.subr.mxu0 0.0
      %887 = vmatpush2.msra.mxu0 0.0
      %888 = vmatprep.subr.mxu0 0.0
      %889 = vmatpush2.msra.mxu0 0.0
      %890 = vmatprep.subr.mxu0 0.0
      %891 = vmatpush2.msra.mxu0 0.0
      %892 = vmatprep.subr.mxu0 0.0
      %893 = vmatpush2.msra.mxu0 0.0
      %894 = vmatprep.subr.mxu0 0.0
      %895 = vmatpush2.msra.mxu0 0.0
      %896 = vmatprep.subr.mxu0 0.0
      %897 = vmatpush2.msra.mxu0 0.0
      %898 = vmatprep.subr.mxu0 0.0
      %899 = vmatpush2.msra.mxu0 0.0
      %900 = vmatprep.subr.mxu0 0.0
      %901 = vmatpush2.msra.mxu0 0.0
      %902 = vmatprep.subr.mxu0 0.0
      %903 = vmatpush2.msra.mxu0 0.0
      %904 = vmatprep.mubr.f32.mxu0 0.0
      %905 = vmatmul.mubr.f32.gmra.mxu0 %v817
      %v906 = vpop.f32.mrf.mxu0
      %v907 = vadd.f32 0.0, %v906
      %v908 = vpop.f32.mrf.mxu0
      %909 = vmatprep.mubr.f32.mxu0 0.0
      %910 = vmatmul.mubr.f32.gmra.mxu0 %v820
      %v911 = vpop.f32.mrf.mxu0
      %v912 = vadd.f32 0.0, %v911
      %v913 = vpop.f32.mrf.mxu0
      %914 = vmatprep.mubr.f32.mxu0 0.0
      %915 = vmatmul.mubr.f32.gmra.mxu0 %v823
      %v916 = vpop.f32.mrf.mxu0
      %v917 = vadd.f32 0.0, %v916
      %v918 = vpop.f32.mrf.mxu0
      %919 = vmatprep.mubr.f32.mxu0 0.0
      %920 = vmatmul.mubr.f32.gmra.mxu0 %v826
      %v921 = vpop.f32.mrf.mxu0
      %v922 = vadd.f32 0.0, %v921
      %v923 = vpop.f32.mrf.mxu0
      %924 = vmatprep.mubr.f32.mxu0 0.0
      %925 = vmatmul.mubr.f32.gmra.mxu0 %v829
      %v926 = vpop.f32.mrf.mxu0
      %v927 = vadd.f32 0.0, %v926
      %v928 = vpop.f32.mrf.mxu0
      %929 = vmatprep.mubr.f32.mxu0 0.0
      %930 = vmatmul.mubr.f32.gmra.mxu0 %v832
      %v931 = vpop.f32.mrf.mxu0
      %v932 = vadd.f32 0.0, %v931
      %v933 = vpop.f32.mrf.mxu0
      %934 = vmatprep.mubr.f32.mxu0 0.0
      %935 = vmatmul.mubr.f32.gmra.mxu0 %v835
      %v936 = vpop.f32.mrf.mxu0
      %v937 = vadd.f32 0.0, %v936
      %v938 = vpop.f32.mrf.mxu0
      %939 = vmatprep.mubr.f32.mxu0 0.0
      %940 = vmatmul.mubr.f32.gmra.mxu0 %v838
      %v941 = vpop.f32.mrf.mxu0
      %v942 = vadd.f32 0.0, %v941
      %v943 = vpop.f32.mrf.mxu0
      %944 = vdwg.mxu0
      %v945 = vmul.f32 %v553, %v730
      %v946 = vmul.f32 %v558, %v735
      %v947 = vmul.f32 %v563, %v740
      %v948 = vmul.f32 %v568, %v745
      %v949 = vmul.f32 %v573, %v750
      %v950 = vmul.f32 %v578, %v755
      %v951 = vmul.f32 %v583, %v760
      %v952 = vmul.f32 %v588, %v765
      %953 = vadd.xlane.f32.xlu0 %v945
      %v954 = vpop.xlane.xlu0 %953
      %955 = vadd.xlane.f32.xlu0 %v946
      %v956 = vpop.xlane.xlu0 %955
      %957 = vadd.xlane.f32.xlu0 %v947
      %v958 = vpop.xlane.xlu0 %957
      %959 = vadd.xlane.f32.xlu0 %v948
      %v960 = vpop.xlane.xlu0 %959
      %961 = vadd.xlane.f32.xlu0 %v949
      %v962 = vpop.xlane.xlu0 %961
      %963 = vadd.xlane.f32.xlu0 %v950
      %v964 = vpop.xlane.xlu0 %963
      %965 = vadd.xlane.f32.xlu0 %v951
      %v966 = vpop.xlane.xlu0 %965
      %967 = vadd.xlane.f32.xlu0 %v952
      %v968 = vpop.xlane.xlu0 %967
      %v969 = vmax.f32 %v954, -1.0
      %v970 = vmax.f32 %v956, -1.0
      %v971 = vmax.f32 %v958, -1.0
      %v972 = vmax.f32 %v960, -1.0
      %v973 = vmax.f32 %v962, -1.0
      %v974 = vmax.f32 %v964, -1.0
      %v975 = vmax.f32 %v966, -1.0
      %v976 = vmax.f32 %v968, -1.0
      %v977 = vmin.f32 %v969, 1.0
      %v978 = vmin.f32 %v970, 1.0
      %v979 = vmin.f32 %v971, 1.0
      %v980 = vmin.f32 %v972, 1.0
      %v981 = vmin.f32 %v973, 1.0
      %v982 = vmin.f32 %v974, 1.0
      %v983 = vmin.f32 %v975, 1.0
      %v984 = vmin.f32 %v976, 1.0
      %v985 = vmul.f32 %v553, %v907
      %v986 = vmul.f32 %v558, %v912
      %v987 = vmul.f32 %v563, %v917
      %v988 = vmul.f32 %v568, %v922
      %v989 = vmul.f32 %v573, %v927
      %v990 = vmul.f32 %v578, %v932
      %v991 = vmul.f32 %v583, %v937
      %v992 = vmul.f32 %v588, %v942
      %993 = vadd.xlane.f32.xlu0 %v985
      %v994 = vpop.xlane.xlu0 %993
      %995 = vadd.xlane.f32.xlu0 %v986
      %v996 = vpop.xlane.xlu0 %995
      %997 = vadd.xlane.f32.xlu0 %v987
      %v998 = vpop.xlane.xlu0 %997
      %999 = vadd.xlane.f32.xlu0 %v988
      %v1000 = vpop.xlane.xlu0 %999
      %1001 = vadd.xlane.f32.xlu0 %v989
      %v1002 = vpop.xlane.xlu0 %1001
      %1003 = vadd.xlane.f32.xlu0 %v990
      %v1004 = vpop.xlane.xlu0 %1003
      %1005 = vadd.xlane.f32.xlu0 %v991
      %v1006 = vpop.xlane.xlu0 %1005
      %1007 = vadd.xlane.f32.xlu0 %v992
      %v1008 = vpop.xlane.xlu0 %1007
      %v1009 = vmax.f32 %v994, -1.0
      %v1010 = vmax.f32 %v996, -1.0
      %v1011 = vmax.f32 %v998, -1.0
      %v1012 = vmax.f32 %v1000, -1.0
      %v1013 = vmax.f32 %v1002, -1.0
      %v1014 = vmax.f32 %v1004, -1.0
      %v1015 = vmax.f32 %v1006, -1.0
      %v1016 = vmax.f32 %v1008, -1.0
      %v1017 = vmin.f32 %v1009, 1.0
      %v1018 = vmin.f32 %v1010, 1.0
      %v1019 = vmin.f32 %v1011, 1.0
      %v1020 = vmin.f32 %v1012, 1.0
      %v1021 = vmin.f32 %v1013, 1.0
      %v1022 = vmin.f32 %v1014, 1.0
      %v1023 = vmin.f32 %v1015, 1.0
      %v1024 = vmin.f32 %v1016, 1.0
      %v1025 = vsub.f32 %v1017, %v977
      %v1026 = vsub.f32 %v1018, %v978
      %v1027 = vsub.f32 %v1019, %v979
      %v1028 = vsub.f32 %v1020, %v980
      %v1029 = vsub.f32 %v1021, %v981
      %v1030 = vsub.f32 %v1022, %v982
      %v1031 = vsub.f32 %v1023, %v983
      %v1032 = vsub.f32 %v1024, %v984
      %v1033 = vmul.f32 %v1025, 1.4285715
      %v1034 = vmul.f32 %v1026, 1.4285715
      %v1035 = vmul.f32 %v1027, 1.4285715
      %v1036 = vmul.f32 %v1028, 1.4285715
      %v1037 = vmul.f32 %v1029, 1.4285715
      %v1038 = vmul.f32 %v1030, 1.4285715
      %v1039 = vmul.f32 %v1031, 1.4285715
      %v1040 = vmul.f32 %v1032, 1.4285715
      %v1041 = vmul.f32 %v1033, 1.442695
      %v1042 = vpow.pop %v1041
      %v1043 = vmul.f32 %v1034, 1.442695
      %v1044 = vpow.pop %v1043
      %v1045 = vmul.f32 %v1035, 1.442695
      %v1046 = vpow.pop %v1045
      %v1047 = vmul.f32 %v1036, 1.442695
      %v1048 = vpow.pop %v1047
      %v1049 = vmul.f32 %v1037, 1.442695
      %v1050 = vpow.pop %v1049
      %v1051 = vmul.f32 %v1038, 1.442695
      %v1052 = vpow.pop %v1051
      %v1053 = vmul.f32 %v1039, 1.442695
      %v1054 = vpow.pop %v1053
      %v1055 = vmul.f32 %v1040, 1.442695
      %v1056 = vpow.pop %v1055
      %s1057 = smul.u32 %s23, 3
      %s1058 = sadd.s32 %s1057, %s24
      %s1059 = smul.u32 %s1058, 64
      %s1060 = sadd.s32 %s1059, 64
      %p1061 = scmp.le.s32.totalorder %s1060, 288
      // Predicated region
      $region41: #{tpu_custom_call.1} parent=35 // pred_check
        %p1062 = pneg %p1061
      $region42: #{tpu_custom_call.1} parent=35 // pred_check_branch
        %1064 = sbr.rel (%p1062) target = $region44
      $region43: #{tpu_custom_call.1} parent=35 // pred_region
        %v1065 = vld [vmem:[%s390] sm:$0x1]
        %v1066 = vadd.f32 %v1042, %v1044
        %v1067 = vadd.f32 %v1066, %v1046
        %v1068 = vadd.f32 %v1067, %v1048
        %v1069 = vadd.f32 %v1068, %v1050
        %v1070 = vadd.f32 %v1069, %v1052
        %v1071 = vadd.f32 %v1070, %v1054
        %v1072 = vadd.f32 %v1071, %v1056
        %v1073 = vrot.slane %v1072, 4
        %v1074 = vadd.f32 %v1072, %v1073
        %v1075 = vrot.slane %v1074, 2
        %v1076 = vadd.f32 %v1074, %v1075
        %v1077 = vrot.slane %v1076, 1
        %v1078 = vadd.f32 %v1076, %v1077
        %v1079 = vadd.f32 %v1065, %v1078
        %vm1080 = vcmask 0
        %1081 = vst.msk [vmem:[%s390] sm:$0x1] %vm1080, %v1079
        %v1082 = vld [vmem:[%s393] sm:$0x1]
        %v1083 = vadd.f32 %v977, %v978
        %v1084 = vadd.f32 %v1083, %v979
        %v1085 = vadd.f32 %v1084, %v980
        %v1086 = vadd.f32 %v1085, %v981
        %v1087 = vadd.f32 %v1086, %v982
        %v1088 = vadd.f32 %v1087, %v983
        %v1089 = vadd.f32 %v1088, %v984
        %v1090 = vrot.slane %v1089, 4
        %v1091 = vadd.f32 %v1089, %v1090
        %v1092 = vrot.slane %v1091, 2
        %v1093 = vadd.f32 %v1091, %v1092
        %v1094 = vrot.slane %v1093, 1
        %v1095 = vadd.f32 %v1093, %v1094
        %v1096 = vadd.f32 %v1082, %v1095
        %1097 = vst.msk [vmem:[%s393] sm:$0x1] %vm1080, %v1096
        %v1098 = vld [vmem:[%s396] sm:$0x1]
        %v1099 = vadd.f32 %v1017, %v1018
        %v1100 = vadd.f32 %v1099, %v1019
        %v1101 = vadd.f32 %v1100, %v1020
        %v1102 = vadd.f32 %v1101, %v1021
        %v1103 = vadd.f32 %v1102, %v1022
        %v1104 = vadd.f32 %v1103, %v1023
        %v1105 = vadd.f32 %v1104, %v1024
        %v1106 = vrot.slane %v1105, 4
        %v1107 = vadd.f32 %v1105, %v1106
        %v1108 = vrot.slane %v1107, 2
        %v1109 = vadd.f32 %v1107, %v1108
        %v1110 = vrot.slane %v1109, 1
        %v1111 = vadd.f32 %v1109, %v1110
        %v1112 = vadd.f32 %v1098, %v1111
        %1113 = vst.msk [vmem:[%s396] sm:$0x1] %vm1080, %v1112
      $region44: #{tpu_custom_call.1} parent=35 // pred_fallthru
        _
      %p1114 = scmp.gt.s32.totalorder %s1060, 288
      // Predicated region
      $region45: #{tpu_custom_call.1} parent=35 // pred_check
        %p1115 = pneg %p1114
      $region46: #{tpu_custom_call.1} parent=35 // pred_check_branch
        %1117 = sbr.rel (%p1115) target = $region48
      $region47: #{tpu_custom_call.1} parent=35 // pred_region
        %v1118 = vlaneseq
        %v1119 = vshrl.u32 %v1118, 7
        %v1120 = vadd.s32 %v1119, 8
        %v1121 = vadd.s32 %v1119, 16
        %v1122 = vadd.s32 %v1119, 24
        %v1123 = vadd.s32 %v1119, 32
        %v1124 = vadd.s32 %v1119, 40
        %v1125 = vadd.s32 %v1119, 48
        %v1126 = vadd.s32 %v1119, 56
        %v1127 = vstv %s1059
        %v1128 = vadd.s32 %v1127, %v1119
        %v1129 = vadd.s32 %v1127, %v1120
        %v1130 = vadd.s32 %v1127, %v1121
        %v1131 = vadd.s32 %v1127, %v1122
        %v1132 = vadd.s32 %v1127, %v1123
        %v1133 = vadd.s32 %v1127, %v1124
        %v1134 = vadd.s32 %v1127, %v1125
        %v1135 = vadd.s32 %v1127, %v1126
        %vm1136 = vcmp.lt.s32.totalorder %v1128, 288
        %vm1137 = vcmp.lt.s32.totalorder %v1129, 288
        %vm1138 = vcmp.lt.s32.totalorder %v1130, 288
        %vm1139 = vcmp.lt.s32.totalorder %v1131, 288
        %vm1140 = vcmp.lt.s32.totalorder %v1132, 288
        %vm1141 = vcmp.lt.s32.totalorder %v1133, 288
        %vm1142 = vcmp.lt.s32.totalorder %v1134, 288
        %vm1143 = vcmp.lt.s32.totalorder %v1135, 288
        %v1144 = vld [vmem:[%s390] sm:$0x1]
        %v1145 = vsel %vm1136, %v1042, 0.0
        %v1146 = vsel %vm1137, %v1044, 0.0
        %v1147 = vsel %vm1138, %v1046, 0.0
        %v1148 = vsel %vm1139, %v1048, 0.0
        %v1149 = vsel %vm1140, %v1050, 0.0
        %v1150 = vsel %vm1141, %v1052, 0.0
        %v1151 = vsel %vm1142, %v1054, 0.0
        %v1152 = vsel %vm1143, %v1056, 0.0
        %v1153 = vadd.f32 %v1145, %v1146
        %v1154 = vadd.f32 %v1153, %v1147
        %v1155 = vadd.f32 %v1154, %v1148
        %v1156 = vadd.f32 %v1155, %v1149
        %v1157 = vadd.f32 %v1156, %v1150
        %v1158 = vadd.f32 %v1157, %v1151
        %v1159 = vadd.f32 %v1158, %v1152
        %v1160 = vrot.slane %v1159, 4
        %v1161 = vadd.f32 %v1159, %v1160
        %v1162 = vrot.slane %v1161, 2
        %v1163 = vadd.f32 %v1161, %v1162
        %v1164 = vrot.slane %v1163, 1
        %v1165 = vadd.f32 %v1163, %v1164
        %v1166 = vadd.f32 %v1144, %v1165
        %vm1167 = vcmask 0
        %1168 = vst.msk [vmem:[%s390] sm:$0x1] %vm1167, %v1166
        %v1169 = vld [vmem:[%s393] sm:$0x1]
        %v1170 = vsel %vm1136, %v977, 0.0
        %v1171 = vsel %vm1137, %v978, 0.0
        %v1172 = vsel %vm1138, %v979, 0.0
        %v1173 = vsel %vm1139, %v980, 0.0
        %v1174 = vsel %vm1140, %v981, 0.0
        %v1175 = vsel %vm1141, %v982, 0.0
        %v1176 = vsel %vm1142, %v983, 0.0
        %v1177 = vsel %vm1143, %v984, 0.0
        %v1178 = vadd.f32 %v1170, %v1171
        %v1179 = vadd.f32 %v1178, %v1172
        %v1180 = vadd.f32 %v1179, %v1173
        %v1181 = vadd.f32 %v1180, %v1174
        %v1182 = vadd.f32 %v1181, %v1175
        %v1183 = vadd.f32 %v1182, %v1176
        %v1184 = vadd.f32 %v1183, %v1177
        %v1185 = vrot.slane %v1184, 4
        %v1186 = vadd.f32 %v1184, %v1185
        %v1187 = vrot.slane %v1186, 2
        %v1188 = vadd.f32 %v1186, %v1187
        %v1189 = vrot.slane %v1188, 1
        %v1190 = vadd.f32 %v1188, %v1189
        %v1191 = vadd.f32 %v1169, %v1190
        %1192 = vst.msk [vmem:[%s393] sm:$0x1] %vm1167, %v1191
        %v1193 = vld [vmem:[%s396] sm:$0x1]
        %v1194 = vsel %vm1136, %v1017, 0.0
        %v1195 = vsel %vm1137, %v1018, 0.0
        %v1196 = vsel %vm1138, %v1019, 0.0
        %v1197 = vsel %vm1139, %v1020, 0.0
        %v1198 = vsel %vm1140, %v1021, 0.0
        %v1199 = vsel %vm1141, %v1022, 0.0
        %v1200 = vsel %vm1142, %v1023, 0.0
        %v1201 = vsel %vm1143, %v1024, 0.0
        %v1202 = vadd.f32 %v1194, %v1195
        %v1203 = vadd.f32 %v1202, %v1196
        %v1204 = vadd.f32 %v1203, %v1197
        %v1205 = vadd.f32 %v1204, %v1198
        %v1206 = vadd.f32 %v1205, %v1199
        %v1207 = vadd.f32 %v1206, %v1200
        %v1208 = vadd.f32 %v1207, %v1201
        %v1209 = vrot.slane %v1208, 4
        %v1210 = vadd.f32 %v1208, %v1209
        %v1211 = vrot.slane %v1210, 2
        %v1212 = vadd.f32 %v1210, %v1211
        %v1213 = vrot.slane %v1212, 1
        %v1214 = vadd.f32 %v1212, %v1213
        %v1215 = vadd.f32 %v1193, %v1214
        %1216 = vst.msk [vmem:[%s396] sm:$0x1] %vm1167, %v1215
      $region48: #{tpu_custom_call.1} parent=35 // pred_fallthru
        _
      %p1217 = scmp.lt.s32.totalorder %s23, 1
      %s1218 = scalar_select %p1217, %s23, 1
      %s1219 = scalar_lea.vmem %s4, %s1218
      %p1220 = scmp.lt.s32.totalorder %s23, 1
      %s1221 = scalar_select %p1220, %s23, 1
      %s1222 = scalar_lea.vmem %s5, %s1221
      %p1223 = scmp.lt.s32.totalorder %s23, 1
      %s1224 = scalar_select %p1223, %s23, 1
      %s1225 = scalar_lea.vmem %s6, %s1224
      %p1226 = scmp.lt.s32.totalorder %s23, 1
      %s1227 = scalar_select %p1226, %s23, 1
      %s1228 = scalar_lea.vmem %s7, %s1227
      // Predicated region
      $region49: #{tpu_custom_call.1} parent=35 // pred_check
        %p1229 = pneg %p160
      $region50: #{tpu_custom_call.1} parent=35 // pred_check_branch
        %1231 = sbr.rel (%p1229) target = $region52
      $region51: #{tpu_custom_call.1} parent=35 // pred_region
        _
      $region52: #{tpu_custom_call.1} parent=35 // pred_fallthru
        _
      // Predicated region
      $region53: #{tpu_custom_call.1} parent=35 // pred_check
        %p1232 = pneg %p186
      $region54: #{tpu_custom_call.1} parent=35 // pred_check_branch
        %1234 = sbr.rel (%p1232) target = $region56
      $region55: #{tpu_custom_call.1} parent=35 // pred_region
        _
      $region56: #{tpu_custom_call.1} parent=35 // pred_fallthru
        _
      // Predicated region
      $region57: #{tpu_custom_call.1} parent=35 // pred_check
        %p1235 = pneg %p212
      $region58: #{tpu_custom_call.1} parent=35 // pred_check_branch
        %1237 = sbr.rel (%p1235) target = $region60
      $region59: #{tpu_custom_call.1} parent=35 // pred_region
        _
      $region60: #{tpu_custom_call.1} parent=35 // pred_fallthru
        _
      // Predicated region
      $region61: #{tpu_custom_call.1} parent=35 // pred_check
        %p1238 = pneg %p238
      $region62: #{tpu_custom_call.1} parent=35 // pred_check_branch
        %1240 = sbr.rel (%p1238) target = $region64
      $region63: #{tpu_custom_call.1} parent=35 // pred_region
        _
      $region64: #{tpu_custom_call.1} parent=35 // pred_fallthru
        _
    $region36: #{tpu_custom_call.1} parent=5 // pred_fallthru
      _
    %p1241 = scmp.le.s32.totalorder 2, %s14
    // Predicated region
    $region65: #{tpu_custom_call.1} parent=5 // pred_check
      %p1242 = pneg %p1241
    $region66: #{tpu_custom_call.1} parent=5 // pred_check_branch
      %1244 = sbr.rel (%p1242) target = $region68
    $region67: #{tpu_custom_call.1} parent=5 // pred_region
      %s1245 = ssub.s32 %s14, 2
      // Predicated region
      $region69: #{tpu_custom_call.1} parent=67 // pred_check
        %p1246 = pneg %p166
      $region70: #{tpu_custom_call.1} parent=67 // pred_check_branch
        %1248 = sbr.rel (%p1246) target = $region72
      $region71: #{tpu_custom_call.1} parent=67 // pred_region
        %p1249 = scmp.lt.s32.totalorder %s25, 1
        %s1250 = scalar_select %p1249, %s25, 1
        %s1251 = scalar_lea.vmem %s4, %s1250
      $region72: #{tpu_custom_call.1} parent=67 // pred_fallthru
        _
      // Predicated region
      $region73: #{tpu_custom_call.1} parent=67 // pred_check
        %p1252 = pneg %p192
      $region74: #{tpu_custom_call.1} parent=67 // pred_check_branch
        %1254 = sbr.rel (%p1252) target = $region76
      $region75: #{tpu_custom_call.1} parent=67 // pred_region
        %p1255 = scmp.lt.s32.totalorder %s25, 1
        %s1256 = scalar_select %p1255, %s25, 1
        %s1257 = scalar_lea.vmem %s5, %s1256
      $region76: #{tpu_custom_call.1} parent=67 // pred_fallthru
        _
      // Predicated region
      $region77: #{tpu_custom_call.1} parent=67 // pred_check
        %p1258 = pneg %p218
      $region78: #{tpu_custom_call.1} parent=67 // pred_check_branch
        %1260 = sbr.rel (%p1258) target = $region80
      $region79: #{tpu_custom_call.1} parent=67 // pred_region
        %p1261 = scmp.lt.s32.totalorder %s25, 1
        %s1262 = scalar_select %p1261, %s25, 1
        %s1263 = scalar_lea.vmem %s6, %s1262
      $region80: #{tpu_custom_call.1} parent=67 // pred_fallthru
        _
      // Predicated region
      $region81: #{tpu_custom_call.1} parent=67 // pred_check
        %p1264 = pneg %p244
      $region82: #{tpu_custom_call.1} parent=67 // pred_check_branch
        %1266 = sbr.rel (%p1264) target = $region84
      $region83: #{tpu_custom_call.1} parent=67 // pred_region
        %p1267 = scmp.lt.s32.totalorder %s25, 1
        %s1268 = scalar_select %p1267, %s25, 1
        %s1269 = scalar_lea.vmem %s7, %s1268
      $region84: #{tpu_custom_call.1} parent=67 // pred_fallthru
        _
    $region68: #{tpu_custom_call.1} parent=5 // pred_fallthru
      _
  $region6: #{tpu_custom_call.1} parent=0 // loop_footer
    %s18 = sadd.s32 1, %s14
  $region7: #{tpu_custom_call.1} parent=0 // loop_footer_branch
    %13 = sbr.rel target = $region3
  $region8: #{tpu_custom_call.1} parent=0 // loop_exit
    _

</llo_original>
